<compile_context>
chip_gen: v7x
topology: tpu7x:2x2x1
jax: 0.10.0
libtpu: 0.0.40
codegen_flags: <defaults>
</compile_context>

<pallas_src>
import numpy as np
import jax
import jax.numpy as jnp
from jax.experimental import pallas as pl
from jax.experimental.pallas import tpu as pltpu


def lstm_classifier_kernel(x_ref, w_ih_ref, w_hh_ref, b_ref, w_fc_ref, b_fc_ref,
                           out_ref, gx_sc):
    """Whole sequence resident in VMEM; recurrence unrolled in-kernel.

    x_ref    : (T, B, Dp)  time-major, lane-padded input
    w_ih_ref : (Dp, 4H)    input->gates weight (rows D..Dp-1 are zero)
    w_hh_ref : (H, 4H)     hidden->gates weight
    b_ref    : (1, 4H)     b_ih + b_hh
    w_fc_ref : (H, C), b_fc_ref : (1, C)
    out_ref  : (B, C)      logits
    gx_sc    : (T, B, 4H)  VMEM scratch holding the hoisted input projection
    Gate order along 4H follows PyTorch: [i, f, g, o].
    """
    T, B, Dp = x_ref.shape
    H = w_hh_ref.shape[0]

    # ---- hoisted input projection: one big matmul, bias folded in ----
    x2 = x_ref[...].reshape(T * B, Dp)
    gx = jnp.dot(x2, w_ih_ref[...], preferred_element_type=jnp.float32) + b_ref[...]
    gx_sc[...] = gx.reshape(T, B, 4 * H)

    # ---- peeled t == 0 step (h = c = 0, so f*c term and h@W_hh vanish) ----
    g0 = gx_sc[0]                               # (B, 4H), contiguous read
    i0 = jax.nn.sigmoid(g0[:, 0:H])
    g0g = jnp.tanh(g0[:, 2 * H:3 * H])
    o0 = jax.nn.sigmoid(g0[:, 3 * H:4 * H])
    c = i0 * g0g
    h = o0 * jnp.tanh(c)

    # ---- remaining steps, fully unrolled (T is small & static) ----
    # Only h @ W_hh sits on the serial critical path now.
    for t in range(1, T):
        g = gx_sc[t] + jnp.dot(h, w_hh_ref[...],
                               preferred_element_type=jnp.float32)
        i_g = jax.nn.sigmoid(g[:, 0:H])          # vreg-aligned (B, H) slabs
        f_g = jax.nn.sigmoid(g[:, H:2 * H])
        g_g = jnp.tanh(g[:, 2 * H:3 * H])
        o_g = jax.nn.sigmoid(g[:, 3 * H:4 * H])
        c = f_g * c + i_g * g_g
        h = o_g * jnp.tanh(c)

    # ---- FC head on the final hidden state ----
    out_ref[...] = (jnp.dot(h, w_fc_ref[...], preferred_element_type=jnp.float32)
                    + b_fc_ref[...]).astype(out_ref.dtype)


@jax.jit
def lstm_classifier(x, w_ih, w_hh, b, w_fc, b_fc):
    """x: (B, T, D) float32 (batch_first, like PyTorch). Returns logits (B, C)."""
    B, T, D = x.shape
    H = w_hh.shape[0]
    C = w_fc.shape[1]
    Dp = ((D + 127) // 128) * 128               # 63 -> 128: lane-aligned K

    # transpose-to-time-major + zero-pad fuse into a single tiny XLA copy;
    # inside the kernel every load is then unmasked and contiguous.
    x_tm = jnp.pad(jnp.transpose(x, (1, 0, 2)), ((0, 0), (0, 0), (0, Dp - D)))
    w_ih_p = jnp.pad(w_ih, ((0, Dp - D), (0, 0)))   # zero rows -> result unchanged

    in_specs = [pl.BlockSpec(memory_space=pltpu.MemorySpace.VMEM)
                for _ in range(6)]
    return pl.pallas_call(
        lstm_classifier_kernel,
        out_shape=jax.ShapeDtypeStruct((B, C), jnp.float32),
        in_specs=in_specs,
        out_specs=pl.BlockSpec(memory_space=pltpu.MemorySpace.VMEM),
        scratch_shapes=[pltpu.VMEM((T, B, 4 * H), jnp.float32)],
    )(x_tm, w_ih_p, w_hh, b, w_fc, b_fc)


def lstm_classifier_ref(x, w_ih, w_hh, b, w_fc, b_fc):
    """Pure-JAX reference matching PyTorch nn.LSTM (batch_first) + nn.Linear."""
    B, T, D = x.shape
    H = w_hh.shape[0]
    h = jnp.zeros((B, H), jnp.float32)
    c = jnp.zeros((B, H), jnp.float32)
    for t in range(T):
        gates = x[:, t, :] @ w_ih + h @ w_hh + b
        i = jax.nn.sigmoid(gates[:, 0:H])
        f = jax.nn.sigmoid(gates[:, H:2 * H])
        g = jnp.tanh(gates[:, 2 * H:3 * H])
        o = jax.nn.sigmoid(gates[:, 3 * H:4 * H])
        c = f * c + i * g
        h = o * jnp.tanh(c)
    return h @ w_fc + b_fc


if __name__ == "__main__":
    # Module defaults: input_size=63, hidden_size=128, num_classes=8
    B, T, D, H, C = 8, 8, 63, 128, 8

    key = jax.random.PRNGKey(0)
    ks = jax.random.split(key, 7)
    bound = 1.0 / np.sqrt(H)  # PyTorch LSTM/Linear default uniform bound

    x = jax.random.normal(ks[0], (B, T, D), dtype=jnp.float32)

    # Stored pre-transposed relative to PyTorch (PyTorch keeps (4H,D)/(4H,H)/(C,H)).
    w_ih = jax.random.uniform(ks[1], (D, 4 * H), jnp.float32, -bound, bound)
    w_hh = jax.random.uniform(ks[2], (H, 4 * H), jnp.float32, -bound, bound)
    b_ih = jax.random.uniform(ks[3], (4 * H,), jnp.float32, -bound, bound)
    b_hh = jax.random.uniform(ks[4], (4 * H,), jnp.float32, -bound, bound)
    b = (b_ih + b_hh).reshape(1, 4 * H)
    w_fc = jax.random.uniform(ks[5], (H, C), jnp.float32, -bound, bound)
    b_fc = jax.random.uniform(ks[6], (1, C), jnp.float32, -bound, bound)

    out = lstm_classifier(x, w_ih, w_hh, b, w_fc, b_fc)
    out = jax.block_until_ready(out)

    ref = lstm_classifier_ref(x, w_ih, w_hh, b, w_fc, b_fc)
    np.testing.assert_allclose(np.asarray(out), np.asarray(ref),
                               rtol=1e-5, atol=1e-5)
    print("KERNEL_OK")
</pallas_src>

<mosaic_0001>
module attributes {stable_mosaic.version = 11 : i64} {
  func.func @lstm_classifier_kernel(%arg0: memref<8x8x128xf32, #tpu.memory_space<vmem>>, %arg1: memref<128x512xf32, #tpu.memory_space<vmem>>, %arg2: memref<128x512xf32, #tpu.memory_space<vmem>>, %arg3: memref<1x512xf32, #tpu.memory_space<vmem>>, %arg4: memref<128x8xf32, #tpu.memory_space<vmem>>, %arg5: memref<1x8xf32, #tpu.memory_space<vmem>>, %arg6: memref<8x8xf32, #tpu.memory_space<vmem>>, %arg7: memref<8x8x512xf32, #tpu.memory_space<vmem>>) attributes {dimension_semantics = [], scalar_prefetch = 0 : i64, scratch_operands = 1 : i64, tpu.core_type = #tpu.core_type<tc>} {
    %c0 = arith.constant 0 : index
    %c0_0 = arith.constant 0 : index
    %c0_1 = arith.constant 0 : index
    %0 = vector.load %arg0[%c0, %c0_0, %c0_1] : memref<8x8x128xf32, #tpu.memory_space<vmem>>, vector<8x8x128xf32>
    %1 = vector.shape_cast %0 : vector<8x8x128xf32> to vector<64x128xf32>
    %c0_2 = arith.constant 0 : index
    %c0_3 = arith.constant 0 : index
    %2 = vector.load %arg1[%c0_2, %c0_3] : memref<128x512xf32, #tpu.memory_space<vmem>>, vector<128x512xf32>
    %cst = arith.constant dense<0.000000e+00> : vector<64x512xf32>
    %3 = tpu.matmul %1, %2, %cst {dimension_numbers = #tpu.dot_dimension_numbers<[1], [0], [0], [1], [0, 0, 1, 1], [], []>} : vector<64x128xf32>, vector<128x512xf32>, vector<64x512xf32> -> vector<64x512xf32>
    %c0_4 = arith.constant 0 : index
    %c0_5 = arith.constant 0 : index
    %4 = vector.load %arg3[%c0_4, %c0_5] : memref<1x512xf32, #tpu.memory_space<vmem>>, vector<1x512xf32>
    %5 = vector.broadcast %4 : vector<1x512xf32> to vector<64x512xf32>
    %6 = arith.addf %3, %5 : vector<64x512xf32>
    %7 = vector.shape_cast %6 : vector<64x512xf32> to vector<8x8x512xf32>
    %c0_6 = arith.constant 0 : index
    %c0_7 = arith.constant 0 : index
    %c0_8 = arith.constant 0 : index
    %8 = vector.load %arg7[%c0_6, %c0_7, %c0_8] : memref<8x8x512xf32, #tpu.memory_space<vmem>>, vector<8x8x512xf32>
    tpu.vector_store %arg7[%c0_6, %c0_7, %c0_8], %7 {strides = array<i32>} : memref<8x8x512xf32, #tpu.memory_space<vmem>>, vector<8x8x512xf32>,
    %c0_9 = arith.constant 0 : index
    %c0_10 = arith.constant 0 : index
    %c0_11 = arith.constant 0 : index
    %9 = vector.load %arg7[%c0_9, %c0_10, %c0_11] : memref<8x8x512xf32, #tpu.memory_space<vmem>>, vector<1x8x512xf32>
    %10 = vector.shape_cast %9 : vector<1x8x512xf32> to vector<8x512xf32>
    %11 = vector.extract_strided_slice %10 {offsets = [0, 0], sizes = [8, 128], strides = [1, 1]} : vector<8x512xf32> to vector<8x128xf32>
    %12 = arith.negf %11 : vector<8x128xf32>
    %13 = math.exp %12 : vector<8x128xf32>
    %cst_12 = arith.constant 1.000000e+00 : f32
    %14 = vector.broadcast %cst_12 : f32 to vector<8x128xf32>
    %15 = arith.addf %14, %13 : vector<8x128xf32>
    %16 = arith.divf %14, %15 : vector<8x128xf32>
    %17 = vector.extract_strided_slice %10 {offsets = [0, 256], sizes = [8, 128], strides = [1, 1]} : vector<8x512xf32> to vector<8x128xf32>
    %18 = math.tanh %17 : vector<8x128xf32>
    %19 = vector.extract_strided_slice %10 {offsets = [0, 384], sizes = [8, 128], strides = [1, 1]} : vector<8x512xf32> to vector<8x128xf32>
    %20 = arith.negf %19 : vector<8x128xf32>
    %21 = math.exp %20 : vector<8x128xf32>
    %cst_13 = arith.constant 1.000000e+00 : f32
    %22 = vector.broadcast %cst_13 : f32 to vector<8x128xf32>
    %23 = arith.addf %22, %21 : vector<8x128xf32>
    %24 = arith.divf %22, %23 : vector<8x128xf32>
    %25 = arith.mulf %16, %18 : vector<8x128xf32>
    %26 = math.tanh %25 : vector<8x128xf32>
    %27 = arith.mulf %24, %26 : vector<8x128xf32>
    %c1 = arith.constant 1 : index
    %c0_14 = arith.constant 0 : index
    %c0_15 = arith.constant 0 : index
    %28 = vector.load %arg7[%c1, %c0_14, %c0_15] : memref<8x8x512xf32, #tpu.memory_space<vmem>>, vector<1x8x512xf32>
    %29 = vector.shape_cast %28 : vector<1x8x512xf32> to vector<8x512xf32>
    %c0_16 = arith.constant 0 : index
    %c0_17 = arith.constant 0 : index
    %30 = vector.load %arg2[%c0_16, %c0_17] : memref<128x512xf32, #tpu.memory_space<vmem>>, vector<128x512xf32>
    %cst_18 = arith.constant dense<0.000000e+00> : vector<8x512xf32>
    %31 = tpu.matmul %27, %30, %cst_18 {dimension_numbers = #tpu.dot_dimension_numbers<[1], [0], [0], [1], [0, 0, 1, 1], [], []>} : vector<8x128xf32>, vector<128x512xf32>, vector<8x512xf32> -> vector<8x512xf32>
    %32 = arith.addf %29, %31 : vector<8x512xf32>
    %33 = vector.extract_strided_slice %32 {offsets = [0, 0], sizes = [8, 128], strides = [1, 1]} : vector<8x512xf32> to vector<8x128xf32>
    %34 = arith.negf %33 : vector<8x128xf32>
    %35 = math.exp %34 : vector<8x128xf32>
    %cst_19 = arith.constant 1.000000e+00 : f32
    %36 = vector.broadcast %cst_19 : f32 to vector<8x128xf32>
    %37 = arith.addf %36, %35 : vector<8x128xf32>
    %38 = arith.divf %36, %37 : vector<8x128xf32>
    %39 = vector.extract_strided_slice %32 {offsets = [0, 128], sizes = [8, 128], strides = [1, 1]} : vector<8x512xf32> to vector<8x128xf32>
    %40 = arith.negf %39 : vector<8x128xf32>
    %41 = math.exp %40 : vector<8x128xf32>
    %cst_20 = arith.constant 1.000000e+00 : f32
    %42 = vector.broadcast %cst_20 : f32 to vector<8x128xf32>
    %43 = arith.addf %42, %41 : vector<8x128xf32>
    %44 = arith.divf %42, %43 : vector<8x128xf32>
    %45 = vector.extract_strided_slice %32 {offsets = [0, 256], sizes = [8, 128], strides = [1, 1]} : vector<8x512xf32> to vector<8x128xf32>
    %46 = math.tanh %45 : vector<8x128xf32>
    %47 = vector.extract_strided_slice %32 {offsets = [0, 384], sizes = [8, 128], strides = [1, 1]} : vector<8x512xf32> to vector<8x128xf32>
    %48 = arith.negf %47 : vector<8x128xf32>
    %49 = math.exp %48 : vector<8x128xf32>
    %cst_21 = arith.constant 1.000000e+00 : f32
    %50 = vector.broadcast %cst_21 : f32 to vector<8x128xf32>
    %51 = arith.addf %50, %49 : vector<8x128xf32>
    %52 = arith.divf %50, %51 : vector<8x128xf32>
    %53 = arith.mulf %44, %25 : vector<8x128xf32>
    %54 = arith.mulf %38, %46 : vector<8x128xf32>
    %55 = arith.addf %53, %54 : vector<8x128xf32>
    %56 = math.tanh %55 : vector<8x128xf32>
    %57 = arith.mulf %52, %56 : vector<8x128xf32>
    %c2 = arith.constant 2 : index
    %c0_22 = arith.constant 0 : index
    %c0_23 = arith.constant 0 : index
    %58 = vector.load %arg7[%c2, %c0_22, %c0_23] : memref<8x8x512xf32, #tpu.memory_space<vmem>>, vector<1x8x512xf32>
    %59 = vector.shape_cast %58 : vector<1x8x512xf32> to vector<8x512xf32>
    %c0_24 = arith.constant 0 : index
    %c0_25 = arith.constant 0 : index
    %60 = vector.load %arg2[%c0_24, %c0_25] : memref<128x512xf32, #tpu.memory_space<vmem>>, vector<128x512xf32>
    %cst_26 = arith.constant dense<0.000000e+00> : vector<8x512xf32>
    %61 = tpu.matmul %57, %60, %cst_26 {dimension_numbers = #tpu.dot_dimension_numbers<[1], [0], [0], [1], [0, 0, 1, 1], [], []>} : vector<8x128xf32>, vector<128x512xf32>, vector<8x512xf32> -> vector<8x512xf32>
    %62 = arith.addf %59, %61 : vector<8x512xf32>
    %63 = vector.extract_strided_slice %62 {offsets = [0, 0], sizes = [8, 128], strides = [1, 1]} : vector<8x512xf32> to vector<8x128xf32>
    %64 = arith.negf %63 : vector<8x128xf32>
    %65 = math.exp %64 : vector<8x128xf32>
    %cst_27 = arith.constant 1.000000e+00 : f32
    %66 = vector.broadcast %cst_27 : f32 to vector<8x128xf32>
    %67 = arith.addf %66, %65 : vector<8x128xf32>
    %68 = arith.divf %66, %67 : vector<8x128xf32>
    %69 = vector.extract_strided_slice %62 {offsets = [0, 128], sizes = [8, 128], strides = [1, 1]} : vector<8x512xf32> to vector<8x128xf32>
    %70 = arith.negf %69 : vector<8x128xf32>
    %71 = math.exp %70 : vector<8x128xf32>
    %cst_28 = arith.constant 1.000000e+00 : f32
    %72 = vector.broadcast %cst_28 : f32 to vector<8x128xf32>
    %73 = arith.addf %72, %71 : vector<8x128xf32>
    %74 = arith.divf %72, %73 : vector<8x128xf32>
    %75 = vector.extract_strided_slice %62 {offsets = [0, 256], sizes = [8, 128], strides = [1, 1]} : vector<8x512xf32> to vector<8x128xf32>
    %76 = math.tanh %75 : vector<8x128xf32>
    %77 = vector.extract_strided_slice %62 {offsets = [0, 384], sizes = [8, 128], strides = [1, 1]} : vector<8x512xf32> to vector<8x128xf32>
    %78 = arith.negf %77 : vector<8x128xf32>
    %79 = math.exp %78 : vector<8x128xf32>
    %cst_29 = arith.constant 1.000000e+00 : f32
    %80 = vector.broadcast %cst_29 : f32 to vector<8x128xf32>
    %81 = arith.addf %80, %79 : vector<8x128xf32>
    %82 = arith.divf %80, %81 : vector<8x128xf32>
    %83 = arith.mulf %74, %55 : vector<8x128xf32>
    %84 = arith.mulf %68, %76 : vector<8x128xf32>
    %85 = arith.addf %83, %84 : vector<8x128xf32>
    %86 = math.tanh %85 : vector<8x128xf32>
    %87 = arith.mulf %82, %86 : vector<8x128xf32>
    %c3 = arith.constant 3 : index
    %c0_30 = arith.constant 0 : index
    %c0_31 = arith.constant 0 : index
    %88 = vector.load %arg7[%c3, %c0_30, %c0_31] : memref<8x8x512xf32, #tpu.memory_space<vmem>>, vector<1x8x512xf32>
    %89 = vector.shape_cast %88 : vector<1x8x512xf32> to vector<8x512xf32>
    %c0_32 = arith.constant 0 : index
    %c0_33 = arith.constant 0 : index
    %90 = vector.load %arg2[%c0_32, %c0_33] : memref<128x512xf32, #tpu.memory_space<vmem>>, vector<128x512xf32>
    %cst_34 = arith.constant dense<0.000000e+00> : vector<8x512xf32>
    %91 = tpu.matmul %87, %90, %cst_34 {dimension_numbers = #tpu.dot_dimension_numbers<[1], [0], [0], [1], [0, 0, 1, 1], [], []>} : vector<8x128xf32>, vector<128x512xf32>, vector<8x512xf32> -> vector<8x512xf32>
    %92 = arith.addf %89, %91 : vector<8x512xf32>
    %93 = vector.extract_strided_slice %92 {offsets = [0, 0], sizes = [8, 128], strides = [1, 1]} : vector<8x512xf32> to vector<8x128xf32>
    %94 = arith.negf %93 : vector<8x128xf32>
    %95 = math.exp %94 : vector<8x128xf32>
    %cst_35 = arith.constant 1.000000e+00 : f32
    %96 = vector.broadcast %cst_35 : f32 to vector<8x128xf32>
    %97 = arith.addf %96, %95 : vector<8x128xf32>
    %98 = arith.divf %96, %97 : vector<8x128xf32>
    %99 = vector.extract_strided_slice %92 {offsets = [0, 128], sizes = [8, 128], strides = [1, 1]} : vector<8x512xf32> to vector<8x128xf32>
    %100 = arith.negf %99 : vector<8x128xf32>
    %101 = math.exp %100 : vector<8x128xf32>
    %cst_36 = arith.constant 1.000000e+00 : f32
    %102 = vector.broadcast %cst_36 : f32 to vector<8x128xf32>
    %103 = arith.addf %102, %101 : vector<8x128xf32>
    %104 = arith.divf %102, %103 : vector<8x128xf32>
    %105 = vector.extract_strided_slice %92 {offsets = [0, 256], sizes = [8, 128], strides = [1, 1]} : vector<8x512xf32> to vector<8x128xf32>
    %106 = math.tanh %105 : vector<8x128xf32>
    %107 = vector.extract_strided_slice %92 {offsets = [0, 384], sizes = [8, 128], strides = [1, 1]} : vector<8x512xf32> to vector<8x128xf32>
    %108 = arith.negf %107 : vector<8x128xf32>
    %109 = math.exp %108 : vector<8x128xf32>
    %cst_37 = arith.constant 1.000000e+00 : f32
    %110 = vector.broadcast %cst_37 : f32 to vector<8x128xf32>
    %111 = arith.addf %110, %109 : vector<8x128xf32>
    %112 = arith.divf %110, %111 : vector<8x128xf32>
    %113 = arith.mulf %104, %85 : vector<8x128xf32>
    %114 = arith.mulf %98, %106 : vector<8x128xf32>
    %115 = arith.addf %113, %114 : vector<8x128xf32>
    %116 = math.tanh %115 : vector<8x128xf32>
    %117 = arith.mulf %112, %116 : vector<8x128xf32>
    %c4 = arith.constant 4 : index
    %c0_38 = arith.constant 0 : index
    %c0_39 = arith.constant 0 : index
    %118 = vector.load %arg7[%c4, %c0_38, %c0_39] : memref<8x8x512xf32, #tpu.memory_space<vmem>>, vector<1x8x512xf32>
    %119 = vector.shape_cast %118 : vector<1x8x512xf32> to vector<8x512xf32>
    %c0_40 = arith.constant 0 : index
    %c0_41 = arith.constant 0 : index
    %120 = vector.load %arg2[%c0_40, %c0_41] : memref<128x512xf32, #tpu.memory_space<vmem>>, vector<128x512xf32>
    %cst_42 = arith.constant dense<0.000000e+00> : vector<8x512xf32>
    %121 = tpu.matmul %117, %120, %cst_42 {dimension_numbers = #tpu.dot_dimension_numbers<[1], [0], [0], [1], [0, 0, 1, 1], [], []>} : vector<8x128xf32>, vector<128x512xf32>, vector<8x512xf32> -> vector<8x512xf32>
    %122 = arith.addf %119, %121 : vector<8x512xf32>
    %123 = vector.extract_strided_slice %122 {offsets = [0, 0], sizes = [8, 128], strides = [1, 1]} : vector<8x512xf32> to vector<8x128xf32>
    %124 = arith.negf %123 : vector<8x128xf32>
    %125 = math.exp %124 : vector<8x128xf32>
    %cst_43 = arith.constant 1.000000e+00 : f32
    %126 = vector.broadcast %cst_43 : f32 to vector<8x128xf32>
    %127 = arith.addf %126, %125 : vector<8x128xf32>
    %128 = arith.divf %126, %127 : vector<8x128xf32>
    %129 = vector.extract_strided_slice %122 {offsets = [0, 128], sizes = [8, 128], strides = [1, 1]} : vector<8x512xf32> to vector<8x128xf32>
    %130 = arith.negf %129 : vector<8x128xf32>
    %131 = math.exp %130 : vector<8x128xf32>
    %cst_44 = arith.constant 1.000000e+00 : f32
    %132 = vector.broadcast %cst_44 : f32 to vector<8x128xf32>
    %133 = arith.addf %132, %131 : vector<8x128xf32>
    %134 = arith.divf %132, %133 : vector<8x128xf32>
    %135 = vector.extract_strided_slice %122 {offsets = [0, 256], sizes = [8, 128], strides = [1, 1]} : vector<8x512xf32> to vector<8x128xf32>
    %136 = math.tanh %135 : vector<8x128xf32>
    %137 = vector.extract_strided_slice %122 {offsets = [0, 384], sizes = [8, 128], strides = [1, 1]} : vector<8x512xf32> to vector<8x128xf32>
    %138 = arith.negf %137 : vector<8x128xf32>
    %139 = math.exp %138 : vector<8x128xf32>
    %cst_45 = arith.constant 1.000000e+00 : f32
    %140 = vector.broadcast %cst_45 : f32 to vector<8x128xf32>
    %141 = arith.addf %140, %139 : vector<8x128xf32>
    %142 = arith.divf %140, %141 : vector<8x128xf32>
    %143 = arith.mulf %134, %115 : vector<8x128xf32>
    %144 = arith.mulf %128, %136 : vector<8x128xf32>
    %145 = arith.addf %143, %144 : vector<8x128xf32>
    %146 = math.tanh %145 : vector<8x128xf32>
    %147 = arith.mulf %142, %146 : vector<8x128xf32>
    %c5 = arith.constant 5 : index
    %c0_46 = arith.constant 0 : index
    %c0_47 = arith.constant 0 : index
    %148 = vector.load %arg7[%c5, %c0_46, %c0_47] : memref<8x8x512xf32, #tpu.memory_space<vmem>>, vector<1x8x512xf32>
    %149 = vector.shape_cast %148 : vector<1x8x512xf32> to vector<8x512xf32>
    %c0_48 = arith.constant 0 : index
    %c0_49 = arith.constant 0 : index
    %150 = vector.load %arg2[%c0_48, %c0_49] : memref<128x512xf32, #tpu.memory_space<vmem>>, vector<128x512xf32>
    %cst_50 = arith.constant dense<0.000000e+00> : vector<8x512xf32>
    %151 = tpu.matmul %147, %150, %cst_50 {dimension_numbers = #tpu.dot_dimension_numbers<[1], [0], [0], [1], [0, 0, 1, 1], [], []>} : vector<8x128xf32>, vector<128x512xf32>, vector<8x512xf32> -> vector<8x512xf32>
    %152 = arith.addf %149, %151 : vector<8x512xf32>
    %153 = vector.extract_strided_slice %152 {offsets = [0, 0], sizes = [8, 128], strides = [1, 1]} : vector<8x512xf32> to vector<8x128xf32>
    %154 = arith.negf %153 : vector<8x128xf32>
    %155 = math.exp %154 : vector<8x128xf32>
    %cst_51 = arith.constant 1.000000e+00 : f32
    %156 = vector.broadcast %cst_51 : f32 to vector<8x128xf32>
    %157 = arith.addf %156, %155 : vector<8x128xf32>
    %158 = arith.divf %156, %157 : vector<8x128xf32>
    %159 = vector.extract_strided_slice %152 {offsets = [0, 128], sizes = [8, 128], strides = [1, 1]} : vector<8x512xf32> to vector<8x128xf32>
    %160 = arith.negf %159 : vector<8x128xf32>
    %161 = math.exp %160 : vector<8x128xf32>
    %cst_52 = arith.constant 1.000000e+00 : f32
    %162 = vector.broadcast %cst_52 : f32 to vector<8x128xf32>
    %163 = arith.addf %162, %161 : vector<8x128xf32>
    %164 = arith.divf %162, %163 : vector<8x128xf32>
    %165 = vector.extract_strided_slice %152 {offsets = [0, 256], sizes = [8, 128], strides = [1, 1]} : vector<8x512xf32> to vector<8x128xf32>
    %166 = math.tanh %165 : vector<8x128xf32>
    %167 = vector.extract_strided_slice %152 {offsets = [0, 384], sizes = [8, 128], strides = [1, 1]} : vector<8x512xf32> to vector<8x128xf32>
    %168 = arith.negf %167 : vector<8x128xf32>
    %169 = math.exp %168 : vector<8x128xf32>
    %cst_53 = arith.constant 1.000000e+00 : f32
    %170 = vector.broadcast %cst_53 : f32 to vector<8x128xf32>
    %171 = arith.addf %170, %169 : vector<8x128xf32>
    %172 = arith.divf %170, %171 : vector<8x128xf32>
    %173 = arith.mulf %164, %145 : vector<8x128xf32>
    %174 = arith.mulf %158, %166 : vector<8x128xf32>
    %175 = arith.addf %173, %174 : vector<8x128xf32>
    %176 = math.tanh %175 : vector<8x128xf32>
    %177 = arith.mulf %172, %176 : vector<8x128xf32>
    %c6 = arith.constant 6 : index
    %c0_54 = arith.constant 0 : index
    %c0_55 = arith.constant 0 : index
    %178 = vector.load %arg7[%c6, %c0_54, %c0_55] : memref<8x8x512xf32, #tpu.memory_space<vmem>>, vector<1x8x512xf32>
    %179 = vector.shape_cast %178 : vector<1x8x512xf32> to vector<8x512xf32>
    %c0_56 = arith.constant 0 : index
    %c0_57 = arith.constant 0 : index
    %180 = vector.load %arg2[%c0_56, %c0_57] : memref<128x512xf32, #tpu.memory_space<vmem>>, vector<128x512xf32>
    %cst_58 = arith.constant dense<0.000000e+00> : vector<8x512xf32>
    %181 = tpu.matmul %177, %180, %cst_58 {dimension_numbers = #tpu.dot_dimension_numbers<[1], [0], [0], [1], [0, 0, 1, 1], [], []>} : vector<8x128xf32>, vector<128x512xf32>, vector<8x512xf32> -> vector<8x512xf32>
    %182 = arith.addf %179, %181 : vector<8x512xf32>
    %183 = vector.extract_strided_slice %182 {offsets = [0, 0], sizes = [8, 128], strides = [1, 1]} : vector<8x512xf32> to vector<8x128xf32>
    %184 = arith.negf %183 : vector<8x128xf32>
    %185 = math.exp %184 : vector<8x128xf32>
    %cst_59 = arith.constant 1.000000e+00 : f32
    %186 = vector.broadcast %cst_59 : f32 to vector<8x128xf32>
    %187 = arith.addf %186, %185 : vector<8x128xf32>
    %188 = arith.divf %186, %187 : vector<8x128xf32>
    %189 = vector.extract_strided_slice %182 {offsets = [0, 128], sizes = [8, 128], strides = [1, 1]} : vector<8x512xf32> to vector<8x128xf32>
    %190 = arith.negf %189 : vector<8x128xf32>
    %191 = math.exp %190 : vector<8x128xf32>
    %cst_60 = arith.constant 1.000000e+00 : f32
    %192 = vector.broadcast %cst_60 : f32 to vector<8x128xf32>
    %193 = arith.addf %192, %191 : vector<8x128xf32>
    %194 = arith.divf %192, %193 : vector<8x128xf32>
    %195 = vector.extract_strided_slice %182 {offsets = [0, 256], sizes = [8, 128], strides = [1, 1]} : vector<8x512xf32> to vector<8x128xf32>
    %196 = math.tanh %195 : vector<8x128xf32>
    %197 = vector.extract_strided_slice %182 {offsets = [0, 384], sizes = [8, 128], strides = [1, 1]} : vector<8x512xf32> to vector<8x128xf32>
    %198 = arith.negf %197 : vector<8x128xf32>
    %199 = math.exp %198 : vector<8x128xf32>
    %cst_61 = arith.constant 1.000000e+00 : f32
    %200 = vector.broadcast %cst_61 : f32 to vector<8x128xf32>
    %201 = arith.addf %200, %199 : vector<8x128xf32>
    %202 = arith.divf %200, %201 : vector<8x128xf32>
    %203 = arith.mulf %194, %175 : vector<8x128xf32>
    %204 = arith.mulf %188, %196 : vector<8x128xf32>
    %205 = arith.addf %203, %204 : vector<8x128xf32>
    %206 = math.tanh %205 : vector<8x128xf32>
    %207 = arith.mulf %202, %206 : vector<8x128xf32>
    %c7 = arith.constant 7 : index
    %c0_62 = arith.constant 0 : index
    %c0_63 = arith.constant 0 : index
    %208 = vector.load %arg7[%c7, %c0_62, %c0_63] : memref<8x8x512xf32, #tpu.memory_space<vmem>>, vector<1x8x512xf32>
    %209 = vector.shape_cast %208 : vector<1x8x512xf32> to vector<8x512xf32>
    %c0_64 = arith.constant 0 : index
    %c0_65 = arith.constant 0 : index
    %210 = vector.load %arg2[%c0_64, %c0_65] : memref<128x512xf32, #tpu.memory_space<vmem>>, vector<128x512xf32>
    %cst_66 = arith.constant dense<0.000000e+00> : vector<8x512xf32>
    %211 = tpu.matmul %207, %210, %cst_66 {dimension_numbers = #tpu.dot_dimension_numbers<[1], [0], [0], [1], [0, 0, 1, 1], [], []>} : vector<8x128xf32>, vector<128x512xf32>, vector<8x512xf32> -> vector<8x512xf32>
    %212 = arith.addf %209, %211 : vector<8x512xf32>
    %213 = vector.extract_strided_slice %212 {offsets = [0, 0], sizes = [8, 128], strides = [1, 1]} : vector<8x512xf32> to vector<8x128xf32>
    %214 = arith.negf %213 : vector<8x128xf32>
    %215 = math.exp %214 : vector<8x128xf32>
    %cst_67 = arith.constant 1.000000e+00 : f32
    %216 = vector.broadcast %cst_67 : f32 to vector<8x128xf32>
    %217 = arith.addf %216, %215 : vector<8x128xf32>
    %218 = arith.divf %216, %217 : vector<8x128xf32>
    %219 = vector.extract_strided_slice %212 {offsets = [0, 128], sizes = [8, 128], strides = [1, 1]} : vector<8x512xf32> to vector<8x128xf32>
    %220 = arith.negf %219 : vector<8x128xf32>
    %221 = math.exp %220 : vector<8x128xf32>
    %cst_68 = arith.constant 1.000000e+00 : f32
    %222 = vector.broadcast %cst_68 : f32 to vector<8x128xf32>
    %223 = arith.addf %222, %221 : vector<8x128xf32>
    %224 = arith.divf %222, %223 : vector<8x128xf32>
    %225 = vector.extract_strided_slice %212 {offsets = [0, 256], sizes = [8, 128], strides = [1, 1]} : vector<8x512xf32> to vector<8x128xf32>
    %226 = math.tanh %225 : vector<8x128xf32>
    %227 = vector.extract_strided_slice %212 {offsets = [0, 384], sizes = [8, 128], strides = [1, 1]} : vector<8x512xf32> to vector<8x128xf32>
    %228 = arith.negf %227 : vector<8x128xf32>
    %229 = math.exp %228 : vector<8x128xf32>
    %cst_69 = arith.constant 1.000000e+00 : f32
    %230 = vector.broadcast %cst_69 : f32 to vector<8x128xf32>
    %231 = arith.addf %230, %229 : vector<8x128xf32>
    %232 = arith.divf %230, %231 : vector<8x128xf32>
    %233 = arith.mulf %224, %205 : vector<8x128xf32>
    %234 = arith.mulf %218, %226 : vector<8x128xf32>
    %235 = arith.addf %233, %234 : vector<8x128xf32>
    %236 = math.tanh %235 : vector<8x128xf32>
    %237 = arith.mulf %232, %236 : vector<8x128xf32>
    %c0_70 = arith.constant 0 : index
    %c0_71 = arith.constant 0 : index
    %238 = vector.load %arg4[%c0_70, %c0_71] : memref<128x8xf32, #tpu.memory_space<vmem>>, vector<128x8xf32>
    %cst_72 = arith.constant dense<0.000000e+00> : vector<8x8xf32>
    %239 = tpu.matmul %237, %238, %cst_72 {dimension_numbers = #tpu.dot_dimension_numbers<[1], [0], [0], [1], [0, 0, 1, 1], [], []>} : vector<8x128xf32>, vector<128x8xf32>, vector<8x8xf32> -> vector<8x8xf32>
    %c0_73 = arith.constant 0 : index
    %c0_74 = arith.constant 0 : index
    %240 = vector.load %arg5[%c0_73, %c0_74] : memref<1x8xf32, #tpu.memory_space<vmem>>, vector<1x8xf32>
    %241 = vector.broadcast %240 : vector<1x8xf32> to vector<8x8xf32>
    %242 = arith.addf %239, %241 : vector<8x8xf32>
    %c0_75 = arith.constant 0 : index
    %c0_76 = arith.constant 0 : index
    %243 = vector.load %arg6[%c0_75, %c0_76] : memref<8x8xf32, #tpu.memory_space<vmem>>, vector<8x8xf32>
    tpu.vector_store %arg6[%c0_75, %c0_76], %242 {strides = array<i32>} : memref<8x8xf32, #tpu.memory_space<vmem>>, vector<8x8xf32>,
    return
  }
}

</mosaic_0001>

<llo_original>
// kernel: lstm_classifier.1
$region0: #{lstm_classifier.1}
  #allocation0 [shape = 'u32[]', space=smem, size = 0x4, offset = 0x4, fixed_abs, tag = 'smem constant byte address 0x4 - core index']
  #allocation1 [shape = 'u32[144,128]{1,0:T(1,128)}', space=vmem, size = 0x12000, scoped, tag = 'internal scratch']
  #allocation2 [shape = 'f32[8,8,512]{2,1,0:T(8,128)}', space=vmem, size = 0x20000, scoped, tag = 'scratch operand']
  %s0 = inlined_call_operand.vmem [shape: f32[8,8,128], index: 0, kind: input, shape index: {}]
  %s1 = inlined_call_operand.vmem [shape: f32[128,512], index: 1, kind: input, shape index: {}]
  %s2 = inlined_call_operand.vmem [shape: f32[128,512], index: 2, kind: input, shape index: {}]
  %s3 = inlined_call_operand.vmem [shape: f32[1,512], index: 3, kind: input, shape index: {}]
  %s4 = inlined_call_operand.vmem [shape: f32[128,8], index: 4, kind: input, shape index: {}]
  %s5 = inlined_call_operand.vmem [shape: f32[1,8], index: 5, kind: input, shape index: {}]
  %s6 = inlined_call_operand.hbm [shape: f32[8,8], index: 6, kind: output, shape index: {}]
  %s7 = sld [smem:[#allocation0]]
  $region34: #{lstm_classifier.1} parent=0
    _
  %s9 = ssub.s32 1, %s7
  %s10 = scalar_select 0, %s9, %s7
  $region1: #{lstm_classifier.1} parent=0
    #allocation3 [shape = 'u8[4096]{0}', space=vmem, size = 0x1000, scoped, tag = 'output window, operand 0, single buffered']
    #allocation4 [shape = 's32[1]{0}', space=sflag, size = 0x4, scoped, tag = 'scoped memory for lstm_classifier.1']
    %11 = vsyncpa [#allocation4], 0
    // Predicated region
    $region2: #{lstm_classifier.1} parent=1 // pred_check
      _
    $region3: #{lstm_classifier.1} parent=1 // pred_check_branch
      %13 = sbr.rel (0) target = $region5
    $region4: #{lstm_classifier.1} parent=1 // pred_region
      _
    $region5: #{lstm_classifier.1} parent=1 // pred_fallthru
      _
    // Predicated region
    $region6: #{lstm_classifier.1} parent=1 // pred_check
      _
    $region7: #{lstm_classifier.1} parent=1 // pred_check_branch
      %15 = sbr.rel (0) target = $region9
    $region8: #{lstm_classifier.1} parent=1 // pred_region
      _
    $region9: #{lstm_classifier.1} parent=1 // pred_fallthru
      _
    // Predicated region
    $region10: #{lstm_classifier.1} parent=1 // pred_check
      _
    $region11: #{lstm_classifier.1} parent=1 // pred_check_branch
      %17 = sbr.rel (0) target = $region13
    $region12: #{lstm_classifier.1} parent=1 // pred_region
      _
    $region13: #{lstm_classifier.1} parent=1 // pred_fallthru
      _
    // Predicated region
    $region14: #{lstm_classifier.1} parent=1 // pred_check
      _
    $region15: #{lstm_classifier.1} parent=1 // pred_check_branch
      %19 = sbr.rel (0) target = $region17
    $region16: #{lstm_classifier.1} parent=1 // pred_region
      _
    $region17: #{lstm_classifier.1} parent=1 // pred_fallthru
      _
    // Predicated region
    $region18: #{lstm_classifier.1} parent=1 // pred_check
      _
    $region19: #{lstm_classifier.1} parent=1 // pred_check_branch
      %21 = sbr.rel (0) target = $region21
    $region20: #{lstm_classifier.1} parent=1 // pred_region
      _
    $region21: #{lstm_classifier.1} parent=1 // pred_fallthru
      _
    // Predicated region
    $region22: #{lstm_classifier.1} parent=1 // pred_check
      _
    $region23: #{lstm_classifier.1} parent=1 // pred_check_branch
      %23 = sbr.rel (0) target = $region25
    $region24: #{lstm_classifier.1} parent=1 // pred_region
      _
    $region25: #{lstm_classifier.1} parent=1 // pred_fallthru
      _
    %v24 = vld [vmem:[%s0] sm:$0xff]
    %v25 = vld [vmem:[%s0 + $0x8] sm:$0xff]
    %v26 = vld [vmem:[%s0 + $0x10] sm:$0xff]
    %v27 = vld [vmem:[%s0 + $0x18] sm:$0xff]
    %v28 = vld [vmem:[%s0 + $0x20] sm:$0xff]
    %v29 = vld [vmem:[%s0 + $0x28] sm:$0xff]
    %v30 = vld [vmem:[%s0 + $0x30] sm:$0xff]
    %v31 = vld [vmem:[%s0 + $0x38] sm:$0xff]
    %v32 = vld [vmem:[%s1] sm:$0xff]
    %v33 = vld [vmem:[%s1 + $0x8] sm:$0xff]
    %v34 = vld [vmem:[%s1 + $0x10] sm:$0xff]
    %v35 = vld [vmem:[%s1 + $0x18] sm:$0xff]
    %v36 = vld [vmem:[%s1 + $0x20] sm:$0xff]
    %v37 = vld [vmem:[%s1 + $0x28] sm:$0xff]
    %v38 = vld [vmem:[%s1 + $0x30] sm:$0xff]
    %v39 = vld [vmem:[%s1 + $0x38] sm:$0xff]
    %v40 = vld [vmem:[%s1 + $0x40] sm:$0xff]
    %v41 = vld [vmem:[%s1 + $0x48] sm:$0xff]
    %v42 = vld [vmem:[%s1 + $0x50] sm:$0xff]
    %v43 = vld [vmem:[%s1 + $0x58] sm:$0xff]
    %v44 = vld [vmem:[%s1 + $0x60] sm:$0xff]
    %v45 = vld [vmem:[%s1 + $0x68] sm:$0xff]
    %v46 = vld [vmem:[%s1 + $0x70] sm:$0xff]
    %v47 = vld [vmem:[%s1 + $0x78] sm:$0xff]
    %v48 = vld [vmem:[%s1 + $0x80] sm:$0xff]
    %v49 = vld [vmem:[%s1 + $0x88] sm:$0xff]
    %v50 = vld [vmem:[%s1 + $0x90] sm:$0xff]
    %v51 = vld [vmem:[%s1 + $0x98] sm:$0xff]
    %v52 = vld [vmem:[%s1 + $0xa0] sm:$0xff]
    %v53 = vld [vmem:[%s1 + $0xa8] sm:$0xff]
    %v54 = vld [vmem:[%s1 + $0xb0] sm:$0xff]
    %v55 = vld [vmem:[%s1 + $0xb8] sm:$0xff]
    %v56 = vld [vmem:[%s1 + $0xc0] sm:$0xff]
    %v57 = vld [vmem:[%s1 + $0xc8] sm:$0xff]
    %v58 = vld [vmem:[%s1 + $0xd0] sm:$0xff]
    %v59 = vld [vmem:[%s1 + $0xd8] sm:$0xff]
    %v60 = vld [vmem:[%s1 + $0xe0] sm:$0xff]
    %v61 = vld [vmem:[%s1 + $0xe8] sm:$0xff]
    %v62 = vld [vmem:[%s1 + $0xf0] sm:$0xff]
    %v63 = vld [vmem:[%s1 + $0xf8] sm:$0xff]
    %v64 = vld [vmem:[%s1 + $0x100] sm:$0xff]
    %v65 = vld [vmem:[%s1 + $0x108] sm:$0xff]
    %v66 = vld [vmem:[%s1 + $0x110] sm:$0xff]
    %v67 = vld [vmem:[%s1 + $0x118] sm:$0xff]
    %v68 = vld [vmem:[%s1 + $0x120] sm:$0xff]
    %v69 = vld [vmem:[%s1 + $0x128] sm:$0xff]
    %v70 = vld [vmem:[%s1 + $0x130] sm:$0xff]
    %v71 = vld [vmem:[%s1 + $0x138] sm:$0xff]
    %v72 = vld [vmem:[%s1 + $0x140] sm:$0xff]
    %v73 = vld [vmem:[%s1 + $0x148] sm:$0xff]
    %v74 = vld [vmem:[%s1 + $0x150] sm:$0xff]
    %v75 = vld [vmem:[%s1 + $0x158] sm:$0xff]
    %v76 = vld [vmem:[%s1 + $0x160] sm:$0xff]
    %v77 = vld [vmem:[%s1 + $0x168] sm:$0xff]
    %v78 = vld [vmem:[%s1 + $0x170] sm:$0xff]
    %v79 = vld [vmem:[%s1 + $0x178] sm:$0xff]
    %v80 = vld [vmem:[%s1 + $0x180] sm:$0xff]
    %v81 = vld [vmem:[%s1 + $0x188] sm:$0xff]
    %v82 = vld [vmem:[%s1 + $0x190] sm:$0xff]
    %v83 = vld [vmem:[%s1 + $0x198] sm:$0xff]
    %v84 = vld [vmem:[%s1 + $0x1a0] sm:$0xff]
    %v85 = vld [vmem:[%s1 + $0x1a8] sm:$0xff]
    %v86 = vld [vmem:[%s1 + $0x1b0] sm:$0xff]
    %v87 = vld [vmem:[%s1 + $0x1b8] sm:$0xff]
    %v88 = vld [vmem:[%s1 + $0x1c0] sm:$0xff]
    %v89 = vld [vmem:[%s1 + $0x1c8] sm:$0xff]
    %v90 = vld [vmem:[%s1 + $0x1d0] sm:$0xff]
    %v91 = vld [vmem:[%s1 + $0x1d8] sm:$0xff]
    %v92 = vld [vmem:[%s1 + $0x1e0] sm:$0xff]
    %v93 = vld [vmem:[%s1 + $0x1e8] sm:$0xff]
    %v94 = vld [vmem:[%s1 + $0x1f0] sm:$0xff]
    %v95 = vld [vmem:[%s1 + $0x1f8] sm:$0xff]
    %v96 = vld [vmem:[%s3] sm:$0xf]
    %v98 = vlaneseq
    %v99 = vshrl.u32 %v98, 7
    %v100 = vsub.s32 0, %v99
    %v101 = vrot.slane %v96, %v100
    %v102 = vlaneseq
    %v103 = vshrl.u32 %v102, 7
    %v104 = vsub.s32 1, %v103
    %v105 = vrot.slane %v96, %v104
    %v106 = vlaneseq
    %v107 = vshrl.u32 %v106, 7
    %v108 = vsub.s32 2, %v107
    %v109 = vrot.slane %v96, %v108
    %v110 = vlaneseq
    %v111 = vshrl.u32 %v110, 7
    %v112 = vsub.s32 3, %v111
    %v113 = vrot.slane %v96, %v112
    %118 = vmatprep.subr.mxu0 %v33
    %119 = vmatpush1.msra.mxu0 %v32
    %120 = vmatprep.subr.mxu0 %v37
    %121 = vmatpush1.msra.mxu0 %v36
    %122 = vmatprep.subr.mxu0 %v41
    %123 = vmatpush1.msra.mxu0 %v40
    %124 = vmatprep.subr.mxu0 %v45
    %125 = vmatpush1.msra.mxu0 %v44
    %126 = vmatprep.subr.mxu0 %v49
    %127 = vmatpush1.msra.mxu0 %v48
    %128 = vmatprep.subr.mxu0 %v53
    %129 = vmatpush1.msra.mxu0 %v52
    %130 = vmatprep.subr.mxu0 %v57
    %131 = vmatpush1.msra.mxu0 %v56
    %132 = vmatprep.subr.mxu0 %v61
    %133 = vmatpush1.msra.mxu0 %v60
    %134 = vmatprep.subr.mxu0 %v65
    %135 = vmatpush1.msra.mxu0 %v64
    %136 = vmatprep.subr.mxu0 %v69
    %137 = vmatpush1.msra.mxu0 %v68
    %138 = vmatprep.subr.mxu0 %v73
    %139 = vmatpush1.msra.mxu0 %v72
    %140 = vmatprep.subr.mxu0 %v77
    %141 = vmatpush1.msra.mxu0 %v76
    %142 = vmatprep.subr.mxu0 %v81
    %143 = vmatpush1.msra.mxu0 %v80
    %144 = vmatprep.subr.mxu0 %v85
    %145 = vmatpush1.msra.mxu0 %v84
    %146 = vmatprep.subr.mxu0 %v89
    %147 = vmatpush1.msra.mxu0 %v88
    %148 = vmatprep.subr.mxu0 %v93
    %149 = vmatpush1.msra.mxu0 %v92
    %150 = vmatprep.subr.mxu0 0.0
    %151 = vmatpush1.msra.mxu0 0.0
    %152 = vmatprep.subr.mxu0 0.0
    %153 = vmatpush1.msra.mxu0 0.0
    %154 = vmatprep.subr.mxu0 0.0
    %155 = vmatpush1.msra.mxu0 0.0
    %156 = vmatprep.subr.mxu0 0.0
    %157 = vmatpush1.msra.mxu0 0.0
    %158 = vmatprep.subr.mxu0 0.0
    %159 = vmatpush1.msra.mxu0 0.0
    %160 = vmatprep.subr.mxu0 0.0
    %161 = vmatpush1.msra.mxu0 0.0
    %162 = vmatprep.subr.mxu0 0.0
    %163 = vmatpush1.msra.mxu0 0.0
    %164 = vmatprep.subr.mxu0 0.0
    %165 = vmatpush1.msra.mxu0 0.0
    %166 = vmatprep.subr.mxu0 0.0
    %167 = vmatpush1.msra.mxu0 0.0
    %168 = vmatprep.subr.mxu0 0.0
    %169 = vmatpush1.msra.mxu0 0.0
    %170 = vmatprep.subr.mxu0 0.0
    %171 = vmatpush1.msra.mxu0 0.0
    %172 = vmatprep.subr.mxu0 0.0
    %173 = vmatpush1.msra.mxu0 0.0
    %174 = vmatprep.subr.mxu0 0.0
    %175 = vmatpush1.msra.mxu0 0.0
    %176 = vmatprep.subr.mxu0 0.0
    %177 = vmatpush1.msra.mxu0 0.0
    %178 = vmatprep.subr.mxu0 0.0
    %179 = vmatpush1.msra.mxu0 0.0
    %180 = vmatprep.subr.mxu0 0.0
    %181 = vmatpush1.msra.mxu0 0.0
    %182 = vmatprep.mubr.f32.mxu0 0.0
    %183 = vmatmul.mubr.f32.gmra.mrb[0].mxu0 %v24
    %v184 = vpop.f32.mrb[0].mxu0
    %v185 = vadd.f32 %v101, %v184
    %v186 = vpop.f32.mrb[0].mxu0
    %v187 = vadd.f32 %v105, %v186
    %188 = vmatprep.mubr.f32.mxu0 0.0
    %189 = vmatmul.mubr.f32.gmra.mrb[0].mxu0 %v25
    %v190 = vpop.f32.mrb[0].mxu0
    %v191 = vadd.f32 %v101, %v190
    %v192 = vpop.f32.mrb[0].mxu0
    %v193 = vadd.f32 %v105, %v192
    %194 = vmatprep.mubr.f32.mxu0 0.0
    %195 = vmatmul.mubr.f32.gmra.mrb[0].mxu0 %v26
    %v196 = vpop.f32.mrb[0].mxu0
    %v197 = vadd.f32 %v101, %v196
    %v198 = vpop.f32.mrb[0].mxu0
    %v199 = vadd.f32 %v105, %v198
    %200 = vmatprep.mubr.f32.mxu0 0.0
    %201 = vmatmul.mubr.f32.gmra.mrb[0].mxu0 %v27
    %v202 = vpop.f32.mrb[0].mxu0
    %v203 = vadd.f32 %v101, %v202
    %v204 = vpop.f32.mrb[0].mxu0
    %v205 = vadd.f32 %v105, %v204
    %206 = vmatprep.mubr.f32.mxu0 0.0
    %207 = vmatmul.mubr.f32.gmra.mrb[0].mxu0 %v28
    %v208 = vpop.f32.mrb[0].mxu0
    %v209 = vadd.f32 %v101, %v208
    %v210 = vpop.f32.mrb[0].mxu0
    %v211 = vadd.f32 %v105, %v210
    %212 = vmatprep.mubr.f32.mxu0 0.0
    %213 = vmatmul.mubr.f32.gmra.mrb[0].mxu0 %v29
    %v214 = vpop.f32.mrb[0].mxu0
    %v215 = vadd.f32 %v101, %v214
    %v216 = vpop.f32.mrb[0].mxu0
    %v217 = vadd.f32 %v105, %v216
    %218 = vmatprep.mubr.f32.mxu0 0.0
    %219 = vmatmul.mubr.f32.gmra.mrb[0].mxu0 %v30
    %v220 = vpop.f32.mrb[0].mxu0
    %v221 = vadd.f32 %v101, %v220
    %v222 = vpop.f32.mrb[0].mxu0
    %v223 = vadd.f32 %v105, %v222
    %224 = vmatprep.mubr.f32.mxu0 0.0
    %225 = vmatmul.mubr.f32.gmra.mrb[0].mxu0 %v31
    %v226 = vpop.f32.mrb[0].mxu0
    %v227 = vadd.f32 %v101, %v226
    %v228 = vpop.f32.mrb[0].mxu0
    %v229 = vadd.f32 %v105, %v228
    %230 = vdwg.mxu0
    %231 = vmatprep.subr.mxu0 %v35
    %232 = vmatpush1.msra.mxu0 %v34
    %233 = vmatprep.subr.mxu0 %v39
    %234 = vmatpush1.msra.mxu0 %v38
    %235 = vmatprep.subr.mxu0 %v43
    %236 = vmatpush1.msra.mxu0 %v42
    %237 = vmatprep.subr.mxu0 %v47
    %238 = vmatpush1.msra.mxu0 %v46
    %239 = vmatprep.subr.mxu0 %v51
    %240 = vmatpush1.msra.mxu0 %v50
    %241 = vmatprep.subr.mxu0 %v55
    %242 = vmatpush1.msra.mxu0 %v54
    %243 = vmatprep.subr.mxu0 %v59
    %244 = vmatpush1.msra.mxu0 %v58
    %245 = vmatprep.subr.mxu0 %v63
    %246 = vmatpush1.msra.mxu0 %v62
    %247 = vmatprep.subr.mxu0 %v67
    %248 = vmatpush1.msra.mxu0 %v66
    %249 = vmatprep.subr.mxu0 %v71
    %250 = vmatpush1.msra.mxu0 %v70
    %251 = vmatprep.subr.mxu0 %v75
    %252 = vmatpush1.msra.mxu0 %v74
    %253 = vmatprep.subr.mxu0 %v79
    %254 = vmatpush1.msra.mxu0 %v78
    %255 = vmatprep.subr.mxu0 %v83
    %256 = vmatpush1.msra.mxu0 %v82
    %257 = vmatprep.subr.mxu0 %v87
    %258 = vmatpush1.msra.mxu0 %v86
    %259 = vmatprep.subr.mxu0 %v91
    %260 = vmatpush1.msra.mxu0 %v90
    %261 = vmatprep.subr.mxu0 %v95
    %262 = vmatpush1.msra.mxu0 %v94
    %263 = vmatprep.subr.mxu0 0.0
    %264 = vmatpush1.msra.mxu0 0.0
    %265 = vmatprep.subr.mxu0 0.0
    %266 = vmatpush1.msra.mxu0 0.0
    %267 = vmatprep.subr.mxu0 0.0
    %268 = vmatpush1.msra.mxu0 0.0
    %269 = vmatprep.subr.mxu0 0.0
    %270 = vmatpush1.msra.mxu0 0.0
    %271 = vmatprep.subr.mxu0 0.0
    %272 = vmatpush1.msra.mxu0 0.0
    %273 = vmatprep.subr.mxu0 0.0
    %274 = vmatpush1.msra.mxu0 0.0
    %275 = vmatprep.subr.mxu0 0.0
    %276 = vmatpush1.msra.mxu0 0.0
    %277 = vmatprep.subr.mxu0 0.0
    %278 = vmatpush1.msra.mxu0 0.0
    %279 = vmatprep.subr.mxu0 0.0
    %280 = vmatpush1.msra.mxu0 0.0
    %281 = vmatprep.subr.mxu0 0.0
    %282 = vmatpush1.msra.mxu0 0.0
    %283 = vmatprep.subr.mxu0 0.0
    %284 = vmatpush1.msra.mxu0 0.0
    %285 = vmatprep.subr.mxu0 0.0
    %286 = vmatpush1.msra.mxu0 0.0
    %287 = vmatprep.subr.mxu0 0.0
    %288 = vmatpush1.msra.mxu0 0.0
    %289 = vmatprep.subr.mxu0 0.0
    %290 = vmatpush1.msra.mxu0 0.0
    %291 = vmatprep.subr.mxu0 0.0
    %292 = vmatpush1.msra.mxu0 0.0
    %293 = vmatprep.subr.mxu0 0.0
    %294 = vmatpush1.msra.mxu0 0.0
    %295 = vmatprep.mubr.f32.mxu0 0.0
    %296 = vmatmul.mubr.f32.gmra.mrb[0].mxu0 %v24
    %v297 = vpop.f32.mrb[0].mxu0
    %v298 = vadd.f32 %v109, %v297
    %v299 = vpop.f32.mrb[0].mxu0
    %v300 = vadd.f32 %v113, %v299
    %301 = vmatprep.mubr.f32.mxu0 0.0
    %302 = vmatmul.mubr.f32.gmra.mrb[0].mxu0 %v25
    %v303 = vpop.f32.mrb[0].mxu0
    %v304 = vadd.f32 %v109, %v303
    %v305 = vpop.f32.mrb[0].mxu0
    %v306 = vadd.f32 %v113, %v305
    %307 = vmatprep.mubr.f32.mxu0 0.0
    %308 = vmatmul.mubr.f32.gmra.mrb[0].mxu0 %v26
    %v309 = vpop.f32.mrb[0].mxu0
    %v310 = vadd.f32 %v109, %v309
    %v311 = vpop.f32.mrb[0].mxu0
    %v312 = vadd.f32 %v113, %v311
    %313 = vmatprep.mubr.f32.mxu0 0.0
    %314 = vmatmul.mubr.f32.gmra.mrb[0].mxu0 %v27
    %v315 = vpop.f32.mrb[0].mxu0
    %v316 = vadd.f32 %v109, %v315
    %v317 = vpop.f32.mrb[0].mxu0
    %v318 = vadd.f32 %v113, %v317
    %319 = vmatprep.mubr.f32.mxu0 0.0
    %320 = vmatmul.mubr.f32.gmra.mrb[0].mxu0 %v28
    %v321 = vpop.f32.mrb[0].mxu0
    %v322 = vadd.f32 %v109, %v321
    %v323 = vpop.f32.mrb[0].mxu0
    %v324 = vadd.f32 %v113, %v323
    %325 = vmatprep.mubr.f32.mxu0 0.0
    %326 = vmatmul.mubr.f32.gmra.mrb[0].mxu0 %v29
    %v327 = vpop.f32.mrb[0].mxu0
    %v328 = vadd.f32 %v109, %v327
    %v329 = vpop.f32.mrb[0].mxu0
    %v330 = vadd.f32 %v113, %v329
    %331 = vmatprep.mubr.f32.mxu0 0.0
    %332 = vmatmul.mubr.f32.gmra.mrb[0].mxu0 %v30
    %v333 = vpop.f32.mrb[0].mxu0
    %v334 = vadd.f32 %v109, %v333
    %v335 = vpop.f32.mrb[0].mxu0
    %v336 = vadd.f32 %v113, %v335
    %337 = vmatprep.mubr.f32.mxu0 0.0
    %338 = vmatmul.mubr.f32.gmra.mrb[0].mxu0 %v31
    %v339 = vpop.f32.mrb[0].mxu0
    %v340 = vadd.f32 %v109, %v339
    %v341 = vpop.f32.mrb[0].mxu0
    %v342 = vadd.f32 %v113, %v341
    %343 = vdwg.mxu0
    %344 = vst [vmem:[#allocation2] sm:$0xff] %v185
    %345 = vst [vmem:[#allocation2 + $0x8] sm:$0xff] %v187
    %346 = vst [vmem:[#allocation2 + $0x10] sm:$0xff] %v298
    %347 = vst [vmem:[#allocation2 + $0x18] sm:$0xff] %v300
    %348 = vst [vmem:[#allocation2 + $0x20] sm:$0xff] %v191
    %349 = vst [vmem:[#allocation2 + $0x28] sm:$0xff] %v193
    %350 = vst [vmem:[#allocation2 + $0x30] sm:$0xff] %v304
    %351 = vst [vmem:[#allocation2 + $0x38] sm:$0xff] %v306
    %352 = vst [vmem:[#allocation2 + $0x40] sm:$0xff] %v197
    %353 = vst [vmem:[#allocation2 + $0x48] sm:$0xff] %v199
    %354 = vst [vmem:[#allocation2 + $0x50] sm:$0xff] %v310
    %355 = vst [vmem:[#allocation2 + $0x58] sm:$0xff] %v312
    %356 = vst [vmem:[#allocation2 + $0x60] sm:$0xff] %v203
    %357 = vst [vmem:[#allocation2 + $0x68] sm:$0xff] %v205
    %358 = vst [vmem:[#allocation2 + $0x70] sm:$0xff] %v316
    %359 = vst [vmem:[#allocation2 + $0x78] sm:$0xff] %v318
    %360 = vst [vmem:[#allocation2 + $0x80] sm:$0xff] %v209
    %361 = vst [vmem:[#allocation2 + $0x88] sm:$0xff] %v211
    %362 = vst [vmem:[#allocation2 + $0x90] sm:$0xff] %v322
    %363 = vst [vmem:[#allocation2 + $0x98] sm:$0xff] %v324
    %364 = vst [vmem:[#allocation2 + $0xa0] sm:$0xff] %v215
    %365 = vst [vmem:[#allocation2 + $0xa8] sm:$0xff] %v217
    %366 = vst [vmem:[#allocation2 + $0xb0] sm:$0xff] %v328
    %367 = vst [vmem:[#allocation2 + $0xb8] sm:$0xff] %v330
    %368 = vst [vmem:[#allocation2 + $0xc0] sm:$0xff] %v221
    %369 = vst [vmem:[#allocation2 + $0xc8] sm:$0xff] %v223
    %370 = vst [vmem:[#allocation2 + $0xd0] sm:$0xff] %v334
    %371 = vst [vmem:[#allocation2 + $0xd8] sm:$0xff] %v336
    %372 = vst [vmem:[#allocation2 + $0xe0] sm:$0xff] %v227
    %373 = vst [vmem:[#allocation2 + $0xe8] sm:$0xff] %v229
    %374 = vst [vmem:[#allocation2 + $0xf0] sm:$0xff] %v340
    %375 = vst [vmem:[#allocation2 + $0xf8] sm:$0xff] %v342
    %v376 = vld [vmem:[#allocation2] sm:$0xff]
    %v377 = vld [vmem:[#allocation2 + $0x10] sm:$0xff]
    %v378 = vld [vmem:[#allocation2 + $0x18] sm:$0xff]
    %v379 = vxor.u32 %v376, 2147483648
    %v380 = vmul.f32 %v379, 1.442695
    %v381 = vpow.pop %v380
    %v382 = vadd.f32 %v381, 1.0
    %v383 = vrcp.pop %v382
    %v384 = vmul.f32 1.0, %v383
    %v385 = vtanh.pop %v377
    %v386 = vxor.u32 %v378, 2147483648
    %v387 = vmul.f32 %v386, 1.442695
    %v388 = vpow.pop %v387
    %v389 = vadd.f32 %v388, 1.0
    %v390 = vrcp.pop %v389
    %v391 = vmul.f32 1.0, %v390
    %v392 = vmul.f32 %v384, %v385
    %v393 = vtanh.pop %v392
    %v394 = vmul.f32 %v391, %v393
    %s395 = scalar_lea.vmem [#allocation2], 32
    %v396 = vld [vmem:[%s395] sm:$0xff]
    %v397 = vld [vmem:[%s395 + $0x8] sm:$0xff]
    %v398 = vld [vmem:[%s395 + $0x10] sm:$0xff]
    %v399 = vld [vmem:[%s395 + $0x18] sm:$0xff]
    %v400 = vld [vmem:[%s2] sm:$0xff]
    %v401 = vld [vmem:[%s2 + $0x8] sm:$0xff]
    %v402 = vld [vmem:[%s2 + $0x10] sm:$0xff]
    %v403 = vld [vmem:[%s2 + $0x18] sm:$0xff]
    %v404 = vld [vmem:[%s2 + $0x20] sm:$0xff]
    %v405 = vld [vmem:[%s2 + $0x28] sm:$0xff]
    %v406 = vld [vmem:[%s2 + $0x30] sm:$0xff]
    %v407 = vld [vmem:[%s2 + $0x38] sm:$0xff]
    %v408 = vld [vmem:[%s2 + $0x40] sm:$0xff]
    %v409 = vld [vmem:[%s2 + $0x48] sm:$0xff]
    %v410 = vld [vmem:[%s2 + $0x50] sm:$0xff]
    %v411 = vld [vmem:[%s2 + $0x58] sm:$0xff]
    %v412 = vld [vmem:[%s2 + $0x60] sm:$0xff]
    %v413 = vld [vmem:[%s2 + $0x68] sm:$0xff]
    %v414 = vld [vmem:[%s2 + $0x70] sm:$0xff]
    %v415 = vld [vmem:[%s2 + $0x78] sm:$0xff]
    %v416 = vld [vmem:[%s2 + $0x80] sm:$0xff]
    %v417 = vld [vmem:[%s2 + $0x88] sm:$0xff]
    %v418 = vld [vmem:[%s2 + $0x90] sm:$0xff]
    %v419 = vld [vmem:[%s2 + $0x98] sm:$0xff]
    %v420 = vld [vmem:[%s2 + $0xa0] sm:$0xff]
    %v421 = vld [vmem:[%s2 + $0xa8] sm:$0xff]
    %v422 = vld [vmem:[%s2 + $0xb0] sm:$0xff]
    %v423 = vld [vmem:[%s2 + $0xb8] sm:$0xff]
    %v424 = vld [vmem:[%s2 + $0xc0] sm:$0xff]
    %v425 = vld [vmem:[%s2 + $0xc8] sm:$0xff]
    %v426 = vld [vmem:[%s2 + $0xd0] sm:$0xff]
    %v427 = vld [vmem:[%s2 + $0xd8] sm:$0xff]
    %v428 = vld [vmem:[%s2 + $0xe0] sm:$0xff]
    %v429 = vld [vmem:[%s2 + $0xe8] sm:$0xff]
    %v430 = vld [vmem:[%s2 + $0xf0] sm:$0xff]
    %v431 = vld [vmem:[%s2 + $0xf8] sm:$0xff]
    %v432 = vld [vmem:[%s2 + $0x100] sm:$0xff]
    %v433 = vld [vmem:[%s2 + $0x108] sm:$0xff]
    %v434 = vld [vmem:[%s2 + $0x110] sm:$0xff]
    %v435 = vld [vmem:[%s2 + $0x118] sm:$0xff]
    %v436 = vld [vmem:[%s2 + $0x120] sm:$0xff]
    %v437 = vld [vmem:[%s2 + $0x128] sm:$0xff]
    %v438 = vld [vmem:[%s2 + $0x130] sm:$0xff]
    %v439 = vld [vmem:[%s2 + $0x138] sm:$0xff]
    %v440 = vld [vmem:[%s2 + $0x140] sm:$0xff]
    %v441 = vld [vmem:[%s2 + $0x148] sm:$0xff]
    %v442 = vld [vmem:[%s2 + $0x150] sm:$0xff]
    %v443 = vld [vmem:[%s2 + $0x158] sm:$0xff]
    %v444 = vld [vmem:[%s2 + $0x160] sm:$0xff]
    %v445 = vld [vmem:[%s2 + $0x168] sm:$0xff]
    %v446 = vld [vmem:[%s2 + $0x170] sm:$0xff]
    %v447 = vld [vmem:[%s2 + $0x178] sm:$0xff]
    %v448 = vld [vmem:[%s2 + $0x180] sm:$0xff]
    %v449 = vld [vmem:[%s2 + $0x188] sm:$0xff]
    %v450 = vld [vmem:[%s2 + $0x190] sm:$0xff]
    %v451 = vld [vmem:[%s2 + $0x198] sm:$0xff]
    %v452 = vld [vmem:[%s2 + $0x1a0] sm:$0xff]
    %v453 = vld [vmem:[%s2 + $0x1a8] sm:$0xff]
    %v454 = vld [vmem:[%s2 + $0x1b0] sm:$0xff]
    %v455 = vld [vmem:[%s2 + $0x1b8] sm:$0xff]
    %v456 = vld [vmem:[%s2 + $0x1c0] sm:$0xff]
    %v457 = vld [vmem:[%s2 + $0x1c8] sm:$0xff]
    %v458 = vld [vmem:[%s2 + $0x1d0] sm:$0xff]
    %v459 = vld [vmem:[%s2 + $0x1d8] sm:$0xff]
    %v460 = vld [vmem:[%s2 + $0x1e0] sm:$0xff]
    %v461 = vld [vmem:[%s2 + $0x1e8] sm:$0xff]
    %v462 = vld [vmem:[%s2 + $0x1f0] sm:$0xff]
    %v463 = vld [vmem:[%s2 + $0x1f8] sm:$0xff]
    %464 = vmatprep.subr.mxu0 %v401
    %465 = vmatpush1.msra.mxu0 %v400
    %466 = vmatprep.subr.mxu0 %v405
    %467 = vmatpush1.msra.mxu0 %v404
    %468 = vmatprep.subr.mxu0 %v409
    %469 = vmatpush1.msra.mxu0 %v408
    %470 = vmatprep.subr.mxu0 %v413
    %471 = vmatpush1.msra.mxu0 %v412
    %472 = vmatprep.subr.mxu0 %v417
    %473 = vmatpush1.msra.mxu0 %v416
    %474 = vmatprep.subr.mxu0 %v421
    %475 = vmatpush1.msra.mxu0 %v420
    %476 = vmatprep.subr.mxu0 %v425
    %477 = vmatpush1.msra.mxu0 %v424
    %478 = vmatprep.subr.mxu0 %v429
    %479 = vmatpush1.msra.mxu0 %v428
    %480 = vmatprep.subr.mxu0 %v433
    %481 = vmatpush1.msra.mxu0 %v432
    %482 = vmatprep.subr.mxu0 %v437
    %483 = vmatpush1.msra.mxu0 %v436
    %484 = vmatprep.subr.mxu0 %v441
    %485 = vmatpush1.msra.mxu0 %v440
    %486 = vmatprep.subr.mxu0 %v445
    %487 = vmatpush1.msra.mxu0 %v444
    %488 = vmatprep.subr.mxu0 %v449
    %489 = vmatpush1.msra.mxu0 %v448
    %490 = vmatprep.subr.mxu0 %v453
    %491 = vmatpush1.msra.mxu0 %v452
    %492 = vmatprep.subr.mxu0 %v457
    %493 = vmatpush1.msra.mxu0 %v456
    %494 = vmatprep.subr.mxu0 %v461
    %495 = vmatpush1.msra.mxu0 %v460
    %496 = vmatprep.subr.mxu0 0.0
    %497 = vmatpush1.msra.mxu0 0.0
    %498 = vmatprep.subr.mxu0 0.0
    %499 = vmatpush1.msra.mxu0 0.0
    %500 = vmatprep.subr.mxu0 0.0
    %501 = vmatpush1.msra.mxu0 0.0
    %502 = vmatprep.subr.mxu0 0.0
    %503 = vmatpush1.msra.mxu0 0.0
    %504 = vmatprep.subr.mxu0 0.0
    %505 = vmatpush1.msra.mxu0 0.0
    %506 = vmatprep.subr.mxu0 0.0
    %507 = vmatpush1.msra.mxu0 0.0
    %508 = vmatprep.subr.mxu0 0.0
    %509 = vmatpush1.msra.mxu0 0.0
    %510 = vmatprep.subr.mxu0 0.0
    %511 = vmatpush1.msra.mxu0 0.0
    %512 = vmatprep.subr.mxu0 0.0
    %513 = vmatpush1.msra.mxu0 0.0
    %514 = vmatprep.subr.mxu0 0.0
    %515 = vmatpush1.msra.mxu0 0.0
    %516 = vmatprep.subr.mxu0 0.0
    %517 = vmatpush1.msra.mxu0 0.0
    %518 = vmatprep.subr.mxu0 0.0
    %519 = vmatpush1.msra.mxu0 0.0
    %520 = vmatprep.subr.mxu0 0.0
    %521 = vmatpush1.msra.mxu0 0.0
    %522 = vmatprep.subr.mxu0 0.0
    %523 = vmatpush1.msra.mxu0 0.0
    %524 = vmatprep.subr.mxu0 0.0
    %525 = vmatpush1.msra.mxu0 0.0
    %526 = vmatprep.subr.mxu0 0.0
    %527 = vmatpush1.msra.mxu0 0.0
    %528 = vmatprep.mubr.f32.mxu0 0.0
    %529 = vmatmul.mubr.f32.gmra.mrb[0].mxu0 %v394
    %v530 = vpop.f32.mrb[0].mxu0
    %v531 = vadd.f32 0.0, %v530
    %v532 = vpop.f32.mrb[0].mxu0
    %v533 = vadd.f32 0.0, %v532
    %534 = vdwg.mxu0
    %535 = vmatprep.subr.mxu0 %v403
    %536 = vmatpush1.msra.mxu0 %v402
    %537 = vmatprep.subr.mxu0 %v407
    %538 = vmatpush1.msra.mxu0 %v406
    %539 = vmatprep.subr.mxu0 %v411
    %540 = vmatpush1.msra.mxu0 %v410
    %541 = vmatprep.subr.mxu0 %v415
    %542 = vmatpush1.msra.mxu0 %v414
    %543 = vmatprep.subr.mxu0 %v419
    %544 = vmatpush1.msra.mxu0 %v418
    %545 = vmatprep.subr.mxu0 %v423
    %546 = vmatpush1.msra.mxu0 %v422
    %547 = vmatprep.subr.mxu0 %v427
    %548 = vmatpush1.msra.mxu0 %v426
    %549 = vmatprep.subr.mxu0 %v431
    %550 = vmatpush1.msra.mxu0 %v430
    %551 = vmatprep.subr.mxu0 %v435
    %552 = vmatpush1.msra.mxu0 %v434
    %553 = vmatprep.subr.mxu0 %v439
    %554 = vmatpush1.msra.mxu0 %v438
    %555 = vmatprep.subr.mxu0 %v443
    %556 = vmatpush1.msra.mxu0 %v442
    %557 = vmatprep.subr.mxu0 %v447
    %558 = vmatpush1.msra.mxu0 %v446
    %559 = vmatprep.subr.mxu0 %v451
    %560 = vmatpush1.msra.mxu0 %v450
    %561 = vmatprep.subr.mxu0 %v455
    %562 = vmatpush1.msra.mxu0 %v454
    %563 = vmatprep.subr.mxu0 %v459
    %564 = vmatpush1.msra.mxu0 %v458
    %565 = vmatprep.subr.mxu0 %v463
    %566 = vmatpush1.msra.mxu0 %v462
    %567 = vmatprep.subr.mxu0 0.0
    %568 = vmatpush1.msra.mxu0 0.0
    %569 = vmatprep.subr.mxu0 0.0
    %570 = vmatpush1.msra.mxu0 0.0
    %571 = vmatprep.subr.mxu0 0.0
    %572 = vmatpush1.msra.mxu0 0.0
    %573 = vmatprep.subr.mxu0 0.0
    %574 = vmatpush1.msra.mxu0 0.0
    %575 = vmatprep.subr.mxu0 0.0
    %576 = vmatpush1.msra.mxu0 0.0
    %577 = vmatprep.subr.mxu0 0.0
    %578 = vmatpush1.msra.mxu0 0.0
    %579 = vmatprep.subr.mxu0 0.0
    %580 = vmatpush1.msra.mxu0 0.0
    %581 = vmatprep.subr.mxu0 0.0
    %582 = vmatpush1.msra.mxu0 0.0
    %583 = vmatprep.subr.mxu0 0.0
    %584 = vmatpush1.msra.mxu0 0.0
    %585 = vmatprep.subr.mxu0 0.0
    %586 = vmatpush1.msra.mxu0 0.0
    %587 = vmatprep.subr.mxu0 0.0
    %588 = vmatpush1.msra.mxu0 0.0
    %589 = vmatprep.subr.mxu0 0.0
    %590 = vmatpush1.msra.mxu0 0.0
    %591 = vmatprep.subr.mxu0 0.0
    %592 = vmatpush1.msra.mxu0 0.0
    %593 = vmatprep.subr.mxu0 0.0
    %594 = vmatpush1.msra.mxu0 0.0
    %595 = vmatprep.subr.mxu0 0.0
    %596 = vmatpush1.msra.mxu0 0.0
    %597 = vmatprep.subr.mxu0 0.0
    %598 = vmatpush1.msra.mxu0 0.0
    %599 = vmatprep.mubr.f32.mxu0 0.0
    %600 = vmatmul.mubr.f32.gmra.mrb[0].mxu0 %v394
    %v601 = vpop.f32.mrb[0].mxu0
    %v602 = vadd.f32 0.0, %v601
    %v603 = vpop.f32.mrb[0].mxu0
    %v604 = vadd.f32 0.0, %v603
    %605 = vdwg.mxu0
    %v606 = vadd.f32 %v396, %v531
    %v607 = vadd.f32 %v397, %v533
    %v608 = vadd.f32 %v398, %v602
    %v609 = vadd.f32 %v399, %v604
    %v610 = vxor.u32 %v606, 2147483648
    %v611 = vmul.f32 %v610, 1.442695
    %v612 = vpow.pop %v611
    %v613 = vadd.f32 %v612, 1.0
    %v614 = vrcp.pop %v613
    %v615 = vmul.f32 1.0, %v614
    %v616 = vxor.u32 %v607, 2147483648
    %v617 = vmul.f32 %v616, 1.442695
    %v618 = vpow.pop %v617
    %v619 = vadd.f32 %v618, 1.0
    %v620 = vrcp.pop %v619
    %v621 = vmul.f32 1.0, %v620
    %v622 = vtanh.pop %v608
    %v623 = vxor.u32 %v609, 2147483648
    %v624 = vmul.f32 %v623, 1.442695
    %v625 = vpow.pop %v624
    %v626 = vadd.f32 %v625, 1.0
    %v627 = vrcp.pop %v626
    %v628 = vmul.f32 1.0, %v627
    %v629 = vmul.f32 %v621, %v392
    %v630 = vmul.f32 %v615, %v622
    %v631 = vadd.f32 %v629, %v630
    %v632 = vtanh.pop %v631
    %v633 = vmul.f32 %v628, %v632
    %s634 = scalar_lea.vmem [#allocation2], 64
    %v635 = vld [vmem:[%s634] sm:$0xff]
    %v636 = vld [vmem:[%s634 + $0x8] sm:$0xff]
    %v637 = vld [vmem:[%s634 + $0x10] sm:$0xff]
    %v638 = vld [vmem:[%s634 + $0x18] sm:$0xff]
    %639 = vmatprep.subr.mxu0 %v401
    %640 = vmatpush1.msra.mxu0 %v400
    %641 = vmatprep.subr.mxu0 %v405
    %642 = vmatpush1.msra.mxu0 %v404
    %643 = vmatprep.subr.mxu0 %v409
    %644 = vmatpush1.msra.mxu0 %v408
    %645 = vmatprep.subr.mxu0 %v413
    %646 = vmatpush1.msra.mxu0 %v412
    %647 = vmatprep.subr.mxu0 %v417
    %648 = vmatpush1.msra.mxu0 %v416
    %649 = vmatprep.subr.mxu0 %v421
    %650 = vmatpush1.msra.mxu0 %v420
    %651 = vmatprep.subr.mxu0 %v425
    %652 = vmatpush1.msra.mxu0 %v424
    %653 = vmatprep.subr.mxu0 %v429
    %654 = vmatpush1.msra.mxu0 %v428
    %655 = vmatprep.subr.mxu0 %v433
    %656 = vmatpush1.msra.mxu0 %v432
    %657 = vmatprep.subr.mxu0 %v437
    %658 = vmatpush1.msra.mxu0 %v436
    %659 = vmatprep.subr.mxu0 %v441
    %660 = vmatpush1.msra.mxu0 %v440
    %661 = vmatprep.subr.mxu0 %v445
    %662 = vmatpush1.msra.mxu0 %v444
    %663 = vmatprep.subr.mxu0 %v449
    %664 = vmatpush1.msra.mxu0 %v448
    %665 = vmatprep.subr.mxu0 %v453
    %666 = vmatpush1.msra.mxu0 %v452
    %667 = vmatprep.subr.mxu0 %v457
    %668 = vmatpush1.msra.mxu0 %v456
    %669 = vmatprep.subr.mxu0 %v461
    %670 = vmatpush1.msra.mxu0 %v460
    %671 = vmatprep.subr.mxu0 0.0
    %672 = vmatpush1.msra.mxu0 0.0
    %673 = vmatprep.subr.mxu0 0.0
    %674 = vmatpush1.msra.mxu0 0.0
    %675 = vmatprep.subr.mxu0 0.0
    %676 = vmatpush1.msra.mxu0 0.0
    %677 = vmatprep.subr.mxu0 0.0
    %678 = vmatpush1.msra.mxu0 0.0
    %679 = vmatprep.subr.mxu0 0.0
    %680 = vmatpush1.msra.mxu0 0.0
    %681 = vmatprep.subr.mxu0 0.0
    %682 = vmatpush1.msra.mxu0 0.0
    %683 = vmatprep.subr.mxu0 0.0
    %684 = vmatpush1.msra.mxu0 0.0
    %685 = vmatprep.subr.mxu0 0.0
    %686 = vmatpush1.msra.mxu0 0.0
    %687 = vmatprep.subr.mxu0 0.0
    %688 = vmatpush1.msra.mxu0 0.0
    %689 = vmatprep.subr.mxu0 0.0
    %690 = vmatpush1.msra.mxu0 0.0
    %691 = vmatprep.subr.mxu0 0.0
    %692 = vmatpush1.msra.mxu0 0.0
    %693 = vmatprep.subr.mxu0 0.0
    %694 = vmatpush1.msra.mxu0 0.0
    %695 = vmatprep.subr.mxu0 0.0
    %696 = vmatpush1.msra.mxu0 0.0
    %697 = vmatprep.subr.mxu0 0.0
    %698 = vmatpush1.msra.mxu0 0.0
    %699 = vmatprep.subr.mxu0 0.0
    %700 = vmatpush1.msra.mxu0 0.0
    %701 = vmatprep.subr.mxu0 0.0
    %702 = vmatpush1.msra.mxu0 0.0
    %703 = vmatprep.mubr.f32.mxu0 0.0
    %704 = vmatmul.mubr.f32.gmra.mrb[0].mxu0 %v633
    %v705 = vpop.f32.mrb[0].mxu0
    %v706 = vadd.f32 0.0, %v705
    %v707 = vpop.f32.mrb[0].mxu0
    %v708 = vadd.f32 0.0, %v707
    %709 = vdwg.mxu0
    %710 = vmatprep.subr.mxu0 %v403
    %711 = vmatpush1.msra.mxu0 %v402
    %712 = vmatprep.subr.mxu0 %v407
    %713 = vmatpush1.msra.mxu0 %v406
    %714 = vmatprep.subr.mxu0 %v411
    %715 = vmatpush1.msra.mxu0 %v410
    %716 = vmatprep.subr.mxu0 %v415
    %717 = vmatpush1.msra.mxu0 %v414
    %718 = vmatprep.subr.mxu0 %v419
    %719 = vmatpush1.msra.mxu0 %v418
    %720 = vmatprep.subr.mxu0 %v423
    %721 = vmatpush1.msra.mxu0 %v422
    %722 = vmatprep.subr.mxu0 %v427
    %723 = vmatpush1.msra.mxu0 %v426
    %724 = vmatprep.subr.mxu0 %v431
    %725 = vmatpush1.msra.mxu0 %v430
    %726 = vmatprep.subr.mxu0 %v435
    %727 = vmatpush1.msra.mxu0 %v434
    %728 = vmatprep.subr.mxu0 %v439
    %729 = vmatpush1.msra.mxu0 %v438
    %730 = vmatprep.subr.mxu0 %v443
    %731 = vmatpush1.msra.mxu0 %v442
    %732 = vmatprep.subr.mxu0 %v447
    %733 = vmatpush1.msra.mxu0 %v446
    %734 = vmatprep.subr.mxu0 %v451
    %735 = vmatpush1.msra.mxu0 %v450
    %736 = vmatprep.subr.mxu0 %v455
    %737 = vmatpush1.msra.mxu0 %v454
    %738 = vmatprep.subr.mxu0 %v459
    %739 = vmatpush1.msra.mxu0 %v458
    %740 = vmatprep.subr.mxu0 %v463
    %741 = vmatpush1.msra.mxu0 %v462
    %742 = vmatprep.subr.mxu0 0.0
    %743 = vmatpush1.msra.mxu0 0.0
    %744 = vmatprep.subr.mxu0 0.0
    %745 = vmatpush1.msra.mxu0 0.0
    %746 = vmatprep.subr.mxu0 0.0
    %747 = vmatpush1.msra.mxu0 0.0
    %748 = vmatprep.subr.mxu0 0.0
    %749 = vmatpush1.msra.mxu0 0.0
    %750 = vmatprep.subr.mxu0 0.0
    %751 = vmatpush1.msra.mxu0 0.0
    %752 = vmatprep.subr.mxu0 0.0
    %753 = vmatpush1.msra.mxu0 0.0
    %754 = vmatprep.subr.mxu0 0.0
    %755 = vmatpush1.msra.mxu0 0.0
    %756 = vmatprep.subr.mxu0 0.0
    %757 = vmatpush1.msra.mxu0 0.0
    %758 = vmatprep.subr.mxu0 0.0
    %759 = vmatpush1.msra.mxu0 0.0
    %760 = vmatprep.subr.mxu0 0.0
    %761 = vmatpush1.msra.mxu0 0.0
    %762 = vmatprep.subr.mxu0 0.0
    %763 = vmatpush1.msra.mxu0 0.0
    %764 = vmatprep.subr.mxu0 0.0
    %765 = vmatpush1.msra.mxu0 0.0
    %766 = vmatprep.subr.mxu0 0.0
    %767 = vmatpush1.msra.mxu0 0.0
    %768 = vmatprep.subr.mxu0 0.0
    %769 = vmatpush1.msra.mxu0 0.0
    %770 = vmatprep.subr.mxu0 0.0
    %771 = vmatpush1.msra.mxu0 0.0
    %772 = vmatprep.subr.mxu0 0.0
    %773 = vmatpush1.msra.mxu0 0.0
    %774 = vmatprep.mubr.f32.mxu0 0.0
    %775 = vmatmul.mubr.f32.gmra.mrb[0].mxu0 %v633
    %v776 = vpop.f32.mrb[0].mxu0
    %v777 = vadd.f32 0.0, %v776
    %v778 = vpop.f32.mrb[0].mxu0
    %v779 = vadd.f32 0.0, %v778
    %780 = vdwg.mxu0
    %v781 = vadd.f32 %v635, %v706
    %v782 = vadd.f32 %v636, %v708
    %v783 = vadd.f32 %v637, %v777
    %v784 = vadd.f32 %v638, %v779
    %v785 = vxor.u32 %v781, 2147483648
    %v786 = vmul.f32 %v785, 1.442695
    %v787 = vpow.pop %v786
    %v788 = vadd.f32 %v787, 1.0
    %v789 = vrcp.pop %v788
    %v790 = vmul.f32 1.0, %v789
    %v791 = vxor.u32 %v782, 2147483648
    %v792 = vmul.f32 %v791, 1.442695
    %v793 = vpow.pop %v792
    %v794 = vadd.f32 %v793, 1.0
    %v795 = vrcp.pop %v794
    %v796 = vmul.f32 1.0, %v795
    %v797 = vtanh.pop %v783
    %v798 = vxor.u32 %v784, 2147483648
    %v799 = vmul.f32 %v798, 1.442695
    %v800 = vpow.pop %v799
    %v801 = vadd.f32 %v800, 1.0
    %v802 = vrcp.pop %v801
    %v803 = vmul.f32 1.0, %v802
    %v804 = vmul.f32 %v796, %v631
    %v805 = vmul.f32 %v790, %v797
    %v806 = vadd.f32 %v804, %v805
    %v807 = vtanh.pop %v806
    %v808 = vmul.f32 %v803, %v807
    %s809 = scalar_lea.vmem [#allocation2], 96
    %v810 = vld [vmem:[%s809] sm:$0xff]
    %v811 = vld [vmem:[%s809 + $0x8] sm:$0xff]
    %v812 = vld [vmem:[%s809 + $0x10] sm:$0xff]
    %v813 = vld [vmem:[%s809 + $0x18] sm:$0xff]
    %814 = vmatprep.subr.mxu0 %v401
    %815 = vmatpush1.msra.mxu0 %v400
    %816 = vmatprep.subr.mxu0 %v405
    %817 = vmatpush1.msra.mxu0 %v404
    %818 = vmatprep.subr.mxu0 %v409
    %819 = vmatpush1.msra.mxu0 %v408
    %820 = vmatprep.subr.mxu0 %v413
    %821 = vmatpush1.msra.mxu0 %v412
    %822 = vmatprep.subr.mxu0 %v417
    %823 = vmatpush1.msra.mxu0 %v416
    %824 = vmatprep.subr.mxu0 %v421
    %825 = vmatpush1.msra.mxu0 %v420
    %826 = vmatprep.subr.mxu0 %v425
    %827 = vmatpush1.msra.mxu0 %v424
    %828 = vmatprep.subr.mxu0 %v429
    %829 = vmatpush1.msra.mxu0 %v428
    %830 = vmatprep.subr.mxu0 %v433
    %831 = vmatpush1.msra.mxu0 %v432
    %832 = vmatprep.subr.mxu0 %v437
    %833 = vmatpush1.msra.mxu0 %v436
    %834 = vmatprep.subr.mxu0 %v441
    %835 = vmatpush1.msra.mxu0 %v440
    %836 = vmatprep.subr.mxu0 %v445
    %837 = vmatpush1.msra.mxu0 %v444
    %838 = vmatprep.subr.mxu0 %v449
    %839 = vmatpush1.msra.mxu0 %v448
    %840 = vmatprep.subr.mxu0 %v453
    %841 = vmatpush1.msra.mxu0 %v452
    %842 = vmatprep.subr.mxu0 %v457
    %843 = vmatpush1.msra.mxu0 %v456
    %844 = vmatprep.subr.mxu0 %v461
    %845 = vmatpush1.msra.mxu0 %v460
    %846 = vmatprep.subr.mxu0 0.0
    %847 = vmatpush1.msra.mxu0 0.0
    %848 = vmatprep.subr.mxu0 0.0
    %849 = vmatpush1.msra.mxu0 0.0
    %850 = vmatprep.subr.mxu0 0.0
    %851 = vmatpush1.msra.mxu0 0.0
    %852 = vmatprep.subr.mxu0 0.0
    %853 = vmatpush1.msra.mxu0 0.0
    %854 = vmatprep.subr.mxu0 0.0
    %855 = vmatpush1.msra.mxu0 0.0
    %856 = vmatprep.subr.mxu0 0.0
    %857 = vmatpush1.msra.mxu0 0.0
    %858 = vmatprep.subr.mxu0 0.0
    %859 = vmatpush1.msra.mxu0 0.0
    %860 = vmatprep.subr.mxu0 0.0
    %861 = vmatpush1.msra.mxu0 0.0
    %862 = vmatprep.subr.mxu0 0.0
    %863 = vmatpush1.msra.mxu0 0.0
    %864 = vmatprep.subr.mxu0 0.0
    %865 = vmatpush1.msra.mxu0 0.0
    %866 = vmatprep.subr.mxu0 0.0
    %867 = vmatpush1.msra.mxu0 0.0
    %868 = vmatprep.subr.mxu0 0.0
    %869 = vmatpush1.msra.mxu0 0.0
    %870 = vmatprep.subr.mxu0 0.0
    %871 = vmatpush1.msra.mxu0 0.0
    %872 = vmatprep.subr.mxu0 0.0
    %873 = vmatpush1.msra.mxu0 0.0
    %874 = vmatprep.subr.mxu0 0.0
    %875 = vmatpush1.msra.mxu0 0.0
    %876 = vmatprep.subr.mxu0 0.0
    %877 = vmatpush1.msra.mxu0 0.0
    %878 = vmatprep.mubr.f32.mxu0 0.0
    %879 = vmatmul.mubr.f32.gmra.mrb[0].mxu0 %v808
    %v880 = vpop.f32.mrb[0].mxu0
    %v881 = vadd.f32 0.0, %v880
    %v882 = vpop.f32.mrb[0].mxu0
    %v883 = vadd.f32 0.0, %v882
    %884 = vdwg.mxu0
    %885 = vmatprep.subr.mxu0 %v403
    %886 = vmatpush1.msra.mxu0 %v402
    %887 = vmatprep.subr.mxu0 %v407
    %888 = vmatpush1.msra.mxu0 %v406
    %889 = vmatprep.subr.mxu0 %v411
    %890 = vmatpush1.msra.mxu0 %v410
    %891 = vmatprep.subr.mxu0 %v415
    %892 = vmatpush1.msra.mxu0 %v414
    %893 = vmatprep.subr.mxu0 %v419
    %894 = vmatpush1.msra.mxu0 %v418
    %895 = vmatprep.subr.mxu0 %v423
    %896 = vmatpush1.msra.mxu0 %v422
    %897 = vmatprep.subr.mxu0 %v427
    %898 = vmatpush1.msra.mxu0 %v426
    %899 = vmatprep.subr.mxu0 %v431
    %900 = vmatpush1.msra.mxu0 %v430
    %901 = vmatprep.subr.mxu0 %v435
    %902 = vmatpush1.msra.mxu0 %v434
    %903 = vmatprep.subr.mxu0 %v439
    %904 = vmatpush1.msra.mxu0 %v438
    %905 = vmatprep.subr.mxu0 %v443
    %906 = vmatpush1.msra.mxu0 %v442
    %907 = vmatprep.subr.mxu0 %v447
    %908 = vmatpush1.msra.mxu0 %v446
    %909 = vmatprep.subr.mxu0 %v451
    %910 = vmatpush1.msra.mxu0 %v450
    %911 = vmatprep.subr.mxu0 %v455
    %912 = vmatpush1.msra.mxu0 %v454
    %913 = vmatprep.subr.mxu0 %v459
    %914 = vmatpush1.msra.mxu0 %v458
    %915 = vmatprep.subr.mxu0 %v463
    %916 = vmatpush1.msra.mxu0 %v462
    %917 = vmatprep.subr.mxu0 0.0
    %918 = vmatpush1.msra.mxu0 0.0
    %919 = vmatprep.subr.mxu0 0.0
    %920 = vmatpush1.msra.mxu0 0.0
    %921 = vmatprep.subr.mxu0 0.0
    %922 = vmatpush1.msra.mxu0 0.0
    %923 = vmatprep.subr.mxu0 0.0
    %924 = vmatpush1.msra.mxu0 0.0
    %925 = vmatprep.subr.mxu0 0.0
    %926 = vmatpush1.msra.mxu0 0.0
    %927 = vmatprep.subr.mxu0 0.0
    %928 = vmatpush1.msra.mxu0 0.0
    %929 = vmatprep.subr.mxu0 0.0
    %930 = vmatpush1.msra.mxu0 0.0
    %931 = vmatprep.subr.mxu0 0.0
    %932 = vmatpush1.msra.mxu0 0.0
    %933 = vmatprep.subr.mxu0 0.0
    %934 = vmatpush1.msra.mxu0 0.0
    %935 = vmatprep.subr.mxu0 0.0
    %936 = vmatpush1.msra.mxu0 0.0
    %937 = vmatprep.subr.mxu0 0.0
    %938 = vmatpush1.msra.mxu0 0.0
    %939 = vmatprep.subr.mxu0 0.0
    %940 = vmatpush1.msra.mxu0 0.0
    %941 = vmatprep.subr.mxu0 0.0
    %942 = vmatpush1.msra.mxu0 0.0
    %943 = vmatprep.subr.mxu0 0.0
    %944 = vmatpush1.msra.mxu0 0.0
    %945 = vmatprep.subr.mxu0 0.0
    %946 = vmatpush1.msra.mxu0 0.0
    %947 = vmatprep.subr.mxu0 0.0
    %948 = vmatpush1.msra.mxu0 0.0
    %949 = vmatprep.mubr.f32.mxu0 0.0
    %950 = vmatmul.mubr.f32.gmra.mrb[0].mxu0 %v808
    %v951 = vpop.f32.mrb[0].mxu0
    %v952 = vadd.f32 0.0, %v951
    %v953 = vpop.f32.mrb[0].mxu0
    %v954 = vadd.f32 0.0, %v953
    %955 = vdwg.mxu0
    %v956 = vadd.f32 %v810, %v881
    %v957 = vadd.f32 %v811, %v883
    %v958 = vadd.f32 %v812, %v952
    %v959 = vadd.f32 %v813, %v954
    %v960 = vxor.u32 %v956, 2147483648
    %v961 = vmul.f32 %v960, 1.442695
    %v962 = vpow.pop %v961
    %v963 = vadd.f32 %v962, 1.0
    %v964 = vrcp.pop %v963
    %v965 = vmul.f32 1.0, %v964
    %v966 = vxor.u32 %v957, 2147483648
    %v967 = vmul.f32 %v966, 1.442695
    %v968 = vpow.pop %v967
    %v969 = vadd.f32 %v968, 1.0
    %v970 = vrcp.pop %v969
    %v971 = vmul.f32 1.0, %v970
    %v972 = vtanh.pop %v958
    %v973 = vxor.u32 %v959, 2147483648
    %v974 = vmul.f32 %v973, 1.442695
    %v975 = vpow.pop %v974
    %v976 = vadd.f32 %v975, 1.0
    %v977 = vrcp.pop %v976
    %v978 = vmul.f32 1.0, %v977
    %v979 = vmul.f32 %v971, %v806
    %v980 = vmul.f32 %v965, %v972
    %v981 = vadd.f32 %v979, %v980
    %v982 = vtanh.pop %v981
    %v983 = vmul.f32 %v978, %v982
    %s984 = scalar_lea.vmem [#allocation2], 128
    %v985 = vld [vmem:[%s984] sm:$0xff]
    %v986 = vld [vmem:[%s984 + $0x8] sm:$0xff]
    %v987 = vld [vmem:[%s984 + $0x10] sm:$0xff]
    %v988 = vld [vmem:[%s984 + $0x18] sm:$0xff]
    %989 = vmatprep.subr.mxu0 %v401
    %990 = vmatpush1.msra.mxu0 %v400
    %991 = vmatprep.subr.mxu0 %v405
    %992 = vmatpush1.msra.mxu0 %v404
    %993 = vmatprep.subr.mxu0 %v409
    %994 = vmatpush1.msra.mxu0 %v408
    %995 = vmatprep.subr.mxu0 %v413
    %996 = vmatpush1.msra.mxu0 %v412
    %997 = vmatprep.subr.mxu0 %v417
    %998 = vmatpush1.msra.mxu0 %v416
    %999 = vmatprep.subr.mxu0 %v421
    %1000 = vmatpush1.msra.mxu0 %v420
    %1001 = vmatprep.subr.mxu0 %v425
    %1002 = vmatpush1.msra.mxu0 %v424
    %1003 = vmatprep.subr.mxu0 %v429
    %1004 = vmatpush1.msra.mxu0 %v428
    %1005 = vmatprep.subr.mxu0 %v433
    %1006 = vmatpush1.msra.mxu0 %v432
    %1007 = vmatprep.subr.mxu0 %v437
    %1008 = vmatpush1.msra.mxu0 %v436
    %1009 = vmatprep.subr.mxu0 %v441
    %1010 = vmatpush1.msra.mxu0 %v440
    %1011 = vmatprep.subr.mxu0 %v445
    %1012 = vmatpush1.msra.mxu0 %v444
    %1013 = vmatprep.subr.mxu0 %v449
    %1014 = vmatpush1.msra.mxu0 %v448
    %1015 = vmatprep.subr.mxu0 %v453
    %1016 = vmatpush1.msra.mxu0 %v452
    %1017 = vmatprep.subr.mxu0 %v457
    %1018 = vmatpush1.msra.mxu0 %v456
    %1019 = vmatprep.subr.mxu0 %v461
    %1020 = vmatpush1.msra.mxu0 %v460
    %1021 = vmatprep.subr.mxu0 0.0
    %1022 = vmatpush1.msra.mxu0 0.0
    %1023 = vmatprep.subr.mxu0 0.0
    %1024 = vmatpush1.msra.mxu0 0.0
    %1025 = vmatprep.subr.mxu0 0.0
    %1026 = vmatpush1.msra.mxu0 0.0
    %1027 = vmatprep.subr.mxu0 0.0
    %1028 = vmatpush1.msra.mxu0 0.0
    %1029 = vmatprep.subr.mxu0 0.0
    %1030 = vmatpush1.msra.mxu0 0.0
    %1031 = vmatprep.subr.mxu0 0.0
    %1032 = vmatpush1.msra.mxu0 0.0
    %1033 = vmatprep.subr.mxu0 0.0
    %1034 = vmatpush1.msra.mxu0 0.0
    %1035 = vmatprep.subr.mxu0 0.0
    %1036 = vmatpush1.msra.mxu0 0.0
    %1037 = vmatprep.subr.mxu0 0.0
    %1038 = vmatpush1.msra.mxu0 0.0
    %1039 = vmatprep.subr.mxu0 0.0
    %1040 = vmatpush1.msra.mxu0 0.0
    %1041 = vmatprep.subr.mxu0 0.0
    %1042 = vmatpush1.msra.mxu0 0.0
    %1043 = vmatprep.subr.mxu0 0.0
    %1044 = vmatpush1.msra.mxu0 0.0
    %1045 = vmatprep.subr.mxu0 0.0
    %1046 = vmatpush1.msra.mxu0 0.0
    %1047 = vmatprep.subr.mxu0 0.0
    %1048 = vmatpush1.msra.mxu0 0.0
    %1049 = vmatprep.subr.mxu0 0.0
    %1050 = vmatpush1.msra.mxu0 0.0
    %1051 = vmatprep.subr.mxu0 0.0
    %1052 = vmatpush1.msra.mxu0 0.0
    %1053 = vmatprep.mubr.f32.mxu0 0.0
    %1054 = vmatmul.mubr.f32.gmra.mrb[0].mxu0 %v983
    %v1055 = vpop.f32.mrb[0].mxu0
    %v1056 = vadd.f32 0.0, %v1055
    %v1057 = vpop.f32.mrb[0].mxu0
    %v1058 = vadd.f32 0.0, %v1057
    %1059 = vdwg.mxu0
    %1060 = vmatprep.subr.mxu0 %v403
    %1061 = vmatpush1.msra.mxu0 %v402
    %1062 = vmatprep.subr.mxu0 %v407
    %1063 = vmatpush1.msra.mxu0 %v406
    %1064 = vmatprep.subr.mxu0 %v411
    %1065 = vmatpush1.msra.mxu0 %v410
    %1066 = vmatprep.subr.mxu0 %v415
    %1067 = vmatpush1.msra.mxu0 %v414
    %1068 = vmatprep.subr.mxu0 %v419
    %1069 = vmatpush1.msra.mxu0 %v418
    %1070 = vmatprep.subr.mxu0 %v423
    %1071 = vmatpush1.msra.mxu0 %v422
    %1072 = vmatprep.subr.mxu0 %v427
    %1073 = vmatpush1.msra.mxu0 %v426
    %1074 = vmatprep.subr.mxu0 %v431
    %1075 = vmatpush1.msra.mxu0 %v430
    %1076 = vmatprep.subr.mxu0 %v435
    %1077 = vmatpush1.msra.mxu0 %v434
    %1078 = vmatprep.subr.mxu0 %v439
    %1079 = vmatpush1.msra.mxu0 %v438
    %1080 = vmatprep.subr.mxu0 %v443
    %1081 = vmatpush1.msra.mxu0 %v442
    %1082 = vmatprep.subr.mxu0 %v447
    %1083 = vmatpush1.msra.mxu0 %v446
    %1084 = vmatprep.subr.mxu0 %v451
    %1085 = vmatpush1.msra.mxu0 %v450
    %1086 = vmatprep.subr.mxu0 %v455
    %1087 = vmatpush1.msra.mxu0 %v454
    %1088 = vmatprep.subr.mxu0 %v459
    %1089 = vmatpush1.msra.mxu0 %v458
    %1090 = vmatprep.subr.mxu0 %v463
    %1091 = vmatpush1.msra.mxu0 %v462
    %1092 = vmatprep.subr.mxu0 0.0
    %1093 = vmatpush1.msra.mxu0 0.0
    %1094 = vmatprep.subr.mxu0 0.0
    %1095 = vmatpush1.msra.mxu0 0.0
    %1096 = vmatprep.subr.mxu0 0.0
    %1097 = vmatpush1.msra.mxu0 0.0
    %1098 = vmatprep.subr.mxu0 0.0
    %1099 = vmatpush1.msra.mxu0 0.0
    %1100 = vmatprep.subr.mxu0 0.0
    %1101 = vmatpush1.msra.mxu0 0.0
    %1102 = vmatprep.subr.mxu0 0.0
    %1103 = vmatpush1.msra.mxu0 0.0
    %1104 = vmatprep.subr.mxu0 0.0
    %1105 = vmatpush1.msra.mxu0 0.0
    %1106 = vmatprep.subr.mxu0 0.0
    %1107 = vmatpush1.msra.mxu0 0.0
    %1108 = vmatprep.subr.mxu0 0.0
    %1109 = vmatpush1.msra.mxu0 0.0
    %1110 = vmatprep.subr.mxu0 0.0
    %1111 = vmatpush1.msra.mxu0 0.0
    %1112 = vmatprep.subr.mxu0 0.0
    %1113 = vmatpush1.msra.mxu0 0.0
    %1114 = vmatprep.subr.mxu0 0.0
    %1115 = vmatpush1.msra.mxu0 0.0
    %1116 = vmatprep.subr.mxu0 0.0
    %1117 = vmatpush1.msra.mxu0 0.0
    %1118 = vmatprep.subr.mxu0 0.0
    %1119 = vmatpush1.msra.mxu0 0.0
    %1120 = vmatprep.subr.mxu0 0.0
    %1121 = vmatpush1.msra.mxu0 0.0
    %1122 = vmatprep.subr.mxu0 0.0
    %1123 = vmatpush1.msra.mxu0 0.0
    %1124 = vmatprep.mubr.f32.mxu0 0.0
    %1125 = vmatmul.mubr.f32.gmra.mrb[0].mxu0 %v983
    %v1126 = vpop.f32.mrb[0].mxu0
    %v1127 = vadd.f32 0.0, %v1126
    %v1128 = vpop.f32.mrb[0].mxu0
    %v1129 = vadd.f32 0.0, %v1128
    %1130 = vdwg.mxu0
    %v1131 = vadd.f32 %v985, %v1056
    %v1132 = vadd.f32 %v986, %v1058
    %v1133 = vadd.f32 %v987, %v1127
    %v1134 = vadd.f32 %v988, %v1129
    %v1135 = vxor.u32 %v1131, 2147483648
    %v1136 = vmul.f32 %v1135, 1.442695
    %v1137 = vpow.pop %v1136
    %v1138 = vadd.f32 %v1137, 1.0
    %v1139 = vrcp.pop %v1138
    %v1140 = vmul.f32 1.0, %v1139
    %v1141 = vxor.u32 %v1132, 2147483648
    %v1142 = vmul.f32 %v1141, 1.442695
    %v1143 = vpow.pop %v1142
    %v1144 = vadd.f32 %v1143, 1.0
    %v1145 = vrcp.pop %v1144
    %v1146 = vmul.f32 1.0, %v1145
    %v1147 = vtanh.pop %v1133
    %v1148 = vxor.u32 %v1134, 2147483648
    %v1149 = vmul.f32 %v1148, 1.442695
    %v1150 = vpow.pop %v1149
    %v1151 = vadd.f32 %v1150, 1.0
    %v1152 = vrcp.pop %v1151
    %v1153 = vmul.f32 1.0, %v1152
    %v1154 = vmul.f32 %v1146, %v981
    %v1155 = vmul.f32 %v1140, %v1147
    %v1156 = vadd.f32 %v1154, %v1155
    %v1157 = vtanh.pop %v1156
    %v1158 = vmul.f32 %v1153, %v1157
    %s1159 = scalar_lea.vmem [#allocation2], 160
    %v1160 = vld [vmem:[%s1159] sm:$0xff]
    %v1161 = vld [vmem:[%s1159 + $0x8] sm:$0xff]
    %v1162 = vld [vmem:[%s1159 + $0x10] sm:$0xff]
    %v1163 = vld [vmem:[%s1159 + $0x18] sm:$0xff]
    %1164 = vmatprep.subr.mxu0 %v401
    %1165 = vmatpush1.msra.mxu0 %v400
    %1166 = vmatprep.subr.mxu0 %v405
    %1167 = vmatpush1.msra.mxu0 %v404
    %1168 = vmatprep.subr.mxu0 %v409
    %1169 = vmatpush1.msra.mxu0 %v408
    %1170 = vmatprep.subr.mxu0 %v413
    %1171 = vmatpush1.msra.mxu0 %v412
    %1172 = vmatprep.subr.mxu0 %v417
    %1173 = vmatpush1.msra.mxu0 %v416
    %1174 = vmatprep.subr.mxu0 %v421
    %1175 = vmatpush1.msra.mxu0 %v420
    %1176 = vmatprep.subr.mxu0 %v425
    %1177 = vmatpush1.msra.mxu0 %v424
    %1178 = vmatprep.subr.mxu0 %v429
    %1179 = vmatpush1.msra.mxu0 %v428
    %1180 = vmatprep.subr.mxu0 %v433
    %1181 = vmatpush1.msra.mxu0 %v432
    %1182 = vmatprep.subr.mxu0 %v437
    %1183 = vmatpush1.msra.mxu0 %v436
    %1184 = vmatprep.subr.mxu0 %v441
    %1185 = vmatpush1.msra.mxu0 %v440
    %1186 = vmatprep.subr.mxu0 %v445
    %1187 = vmatpush1.msra.mxu0 %v444
    %1188 = vmatprep.subr.mxu0 %v449
    %1189 = vmatpush1.msra.mxu0 %v448
    %1190 = vmatprep.subr.mxu0 %v453
    %1191 = vmatpush1.msra.mxu0 %v452
    %1192 = vmatprep.subr.mxu0 %v457
    %1193 = vmatpush1.msra.mxu0 %v456
    %1194 = vmatprep.subr.mxu0 %v461
    %1195 = vmatpush1.msra.mxu0 %v460
    %1196 = vmatprep.subr.mxu0 0.0
    %1197 = vmatpush1.msra.mxu0 0.0
    %1198 = vmatprep.subr.mxu0 0.0
    %1199 = vmatpush1.msra.mxu0 0.0
    %1200 = vmatprep.subr.mxu0 0.0
    %1201 = vmatpush1.msra.mxu0 0.0
    %1202 = vmatprep.subr.mxu0 0.0
    %1203 = vmatpush1.msra.mxu0 0.0
    %1204 = vmatprep.subr.mxu0 0.0
    %1205 = vmatpush1.msra.mxu0 0.0
    %1206 = vmatprep.subr.mxu0 0.0
    %1207 = vmatpush1.msra.mxu0 0.0
    %1208 = vmatprep.subr.mxu0 0.0
    %1209 = vmatpush1.msra.mxu0 0.0
    %1210 = vmatprep.subr.mxu0 0.0
    %1211 = vmatpush1.msra.mxu0 0.0
    %1212 = vmatprep.subr.mxu0 0.0
    %1213 = vmatpush1.msra.mxu0 0.0
    %1214 = vmatprep.subr.mxu0 0.0
    %1215 = vmatpush1.msra.mxu0 0.0
    %1216 = vmatprep.subr.mxu0 0.0
    %1217 = vmatpush1.msra.mxu0 0.0
    %1218 = vmatprep.subr.mxu0 0.0
    %1219 = vmatpush1.msra.mxu0 0.0
    %1220 = vmatprep.subr.mxu0 0.0
    %1221 = vmatpush1.msra.mxu0 0.0
    %1222 = vmatprep.subr.mxu0 0.0
    %1223 = vmatpush1.msra.mxu0 0.0
    %1224 = vmatprep.subr.mxu0 0.0
    %1225 = vmatpush1.msra.mxu0 0.0
    %1226 = vmatprep.subr.mxu0 0.0
    %1227 = vmatpush1.msra.mxu0 0.0
    %1228 = vmatprep.mubr.f32.mxu0 0.0
    %1229 = vmatmul.mubr.f32.gmra.mrb[0].mxu0 %v1158
    %v1230 = vpop.f32.mrb[0].mxu0
    %v1231 = vadd.f32 0.0, %v1230
    %v1232 = vpop.f32.mrb[0].mxu0
    %v1233 = vadd.f32 0.0, %v1232
    %1234 = vdwg.mxu0
    %1235 = vmatprep.subr.mxu0 %v403
    %1236 = vmatpush1.msra.mxu0 %v402
    %1237 = vmatprep.subr.mxu0 %v407
    %1238 = vmatpush1.msra.mxu0 %v406
    %1239 = vmatprep.subr.mxu0 %v411
    %1240 = vmatpush1.msra.mxu0 %v410
    %1241 = vmatprep.subr.mxu0 %v415
    %1242 = vmatpush1.msra.mxu0 %v414
    %1243 = vmatprep.subr.mxu0 %v419
    %1244 = vmatpush1.msra.mxu0 %v418
    %1245 = vmatprep.subr.mxu0 %v423
    %1246 = vmatpush1.msra.mxu0 %v422
    %1247 = vmatprep.subr.mxu0 %v427
    %1248 = vmatpush1.msra.mxu0 %v426
    %1249 = vmatprep.subr.mxu0 %v431
    %1250 = vmatpush1.msra.mxu0 %v430
    %1251 = vmatprep.subr.mxu0 %v435
    %1252 = vmatpush1.msra.mxu0 %v434
    %1253 = vmatprep.subr.mxu0 %v439
    %1254 = vmatpush1.msra.mxu0 %v438
    %1255 = vmatprep.subr.mxu0 %v443
    %1256 = vmatpush1.msra.mxu0 %v442
    %1257 = vmatprep.subr.mxu0 %v447
    %1258 = vmatpush1.msra.mxu0 %v446
    %1259 = vmatprep.subr.mxu0 %v451
    %1260 = vmatpush1.msra.mxu0 %v450
    %1261 = vmatprep.subr.mxu0 %v455
    %1262 = vmatpush1.msra.mxu0 %v454
    %1263 = vmatprep.subr.mxu0 %v459
    %1264 = vmatpush1.msra.mxu0 %v458
    %1265 = vmatprep.subr.mxu0 %v463
    %1266 = vmatpush1.msra.mxu0 %v462
    %1267 = vmatprep.subr.mxu0 0.0
    %1268 = vmatpush1.msra.mxu0 0.0
    %1269 = vmatprep.subr.mxu0 0.0
    %1270 = vmatpush1.msra.mxu0 0.0
    %1271 = vmatprep.subr.mxu0 0.0
    %1272 = vmatpush1.msra.mxu0 0.0
    %1273 = vmatprep.subr.mxu0 0.0
    %1274 = vmatpush1.msra.mxu0 0.0
    %1275 = vmatprep.subr.mxu0 0.0
    %1276 = vmatpush1.msra.mxu0 0.0
    %1277 = vmatprep.subr.mxu0 0.0
    %1278 = vmatpush1.msra.mxu0 0.0
    %1279 = vmatprep.subr.mxu0 0.0
    %1280 = vmatpush1.msra.mxu0 0.0
    %1281 = vmatprep.subr.mxu0 0.0
    %1282 = vmatpush1.msra.mxu0 0.0
    %1283 = vmatprep.subr.mxu0 0.0
    %1284 = vmatpush1.msra.mxu0 0.0
    %1285 = vmatprep.subr.mxu0 0.0
    %1286 = vmatpush1.msra.mxu0 0.0
    %1287 = vmatprep.subr.mxu0 0.0
    %1288 = vmatpush1.msra.mxu0 0.0
    %1289 = vmatprep.subr.mxu0 0.0
    %1290 = vmatpush1.msra.mxu0 0.0
    %1291 = vmatprep.subr.mxu0 0.0
    %1292 = vmatpush1.msra.mxu0 0.0
    %1293 = vmatprep.subr.mxu0 0.0
    %1294 = vmatpush1.msra.mxu0 0.0
    %1295 = vmatprep.subr.mxu0 0.0
    %1296 = vmatpush1.msra.mxu0 0.0
    %1297 = vmatprep.subr.mxu0 0.0
    %1298 = vmatpush1.msra.mxu0 0.0
    %1299 = vmatprep.mubr.f32.mxu0 0.0
    %1300 = vmatmul.mubr.f32.gmra.mrb[0].mxu0 %v1158
    %v1301 = vpop.f32.mrb[0].mxu0
    %v1302 = vadd.f32 0.0, %v1301
    %v1303 = vpop.f32.mrb[0].mxu0
    %v1304 = vadd.f32 0.0, %v1303
    %1305 = vdwg.mxu0
    %v1306 = vadd.f32 %v1160, %v1231
    %v1307 = vadd.f32 %v1161, %v1233
    %v1308 = vadd.f32 %v1162, %v1302
    %v1309 = vadd.f32 %v1163, %v1304
    %v1310 = vxor.u32 %v1306, 2147483648
    %v1311 = vmul.f32 %v1310, 1.442695
    %v1312 = vpow.pop %v1311
    %v1313 = vadd.f32 %v1312, 1.0
    %v1314 = vrcp.pop %v1313
    %v1315 = vmul.f32 1.0, %v1314
    %v1316 = vxor.u32 %v1307, 2147483648
    %v1317 = vmul.f32 %v1316, 1.442695
    %v1318 = vpow.pop %v1317
    %v1319 = vadd.f32 %v1318, 1.0
    %v1320 = vrcp.pop %v1319
    %v1321 = vmul.f32 1.0, %v1320
    %v1322 = vtanh.pop %v1308
    %v1323 = vxor.u32 %v1309, 2147483648
    %v1324 = vmul.f32 %v1323, 1.442695
    %v1325 = vpow.pop %v1324
    %v1326 = vadd.f32 %v1325, 1.0
    %v1327 = vrcp.pop %v1326
    %v1328 = vmul.f32 1.0, %v1327
    %v1329 = vmul.f32 %v1321, %v1156
    %v1330 = vmul.f32 %v1315, %v1322
    %v1331 = vadd.f32 %v1329, %v1330
    %v1332 = vtanh.pop %v1331
    %v1333 = vmul.f32 %v1328, %v1332
    %s1334 = scalar_lea.vmem [#allocation2], 192
    %v1335 = vld [vmem:[%s1334] sm:$0xff]
    %v1336 = vld [vmem:[%s1334 + $0x8] sm:$0xff]
    %v1337 = vld [vmem:[%s1334 + $0x10] sm:$0xff]
    %v1338 = vld [vmem:[%s1334 + $0x18] sm:$0xff]
    %1339 = vmatprep.subr.mxu0 %v401
    %1340 = vmatpush1.msra.mxu0 %v400
    %1341 = vmatprep.subr.mxu0 %v405
    %1342 = vmatpush1.msra.mxu0 %v404
    %1343 = vmatprep.subr.mxu0 %v409
    %1344 = vmatpush1.msra.mxu0 %v408
    %1345 = vmatprep.subr.mxu0 %v413
    %1346 = vmatpush1.msra.mxu0 %v412
    %1347 = vmatprep.subr.mxu0 %v417
    %1348 = vmatpush1.msra.mxu0 %v416
    %1349 = vmatprep.subr.mxu0 %v421
    %1350 = vmatpush1.msra.mxu0 %v420
    %1351 = vmatprep.subr.mxu0 %v425
    %1352 = vmatpush1.msra.mxu0 %v424
    %1353 = vmatprep.subr.mxu0 %v429
    %1354 = vmatpush1.msra.mxu0 %v428
    %1355 = vmatprep.subr.mxu0 %v433
    %1356 = vmatpush1.msra.mxu0 %v432
    %1357 = vmatprep.subr.mxu0 %v437
    %1358 = vmatpush1.msra.mxu0 %v436
    %1359 = vmatprep.subr.mxu0 %v441
    %1360 = vmatpush1.msra.mxu0 %v440
    %1361 = vmatprep.subr.mxu0 %v445
    %1362 = vmatpush1.msra.mxu0 %v444
    %1363 = vmatprep.subr.mxu0 %v449
    %1364 = vmatpush1.msra.mxu0 %v448
    %1365 = vmatprep.subr.mxu0 %v453
    %1366 = vmatpush1.msra.mxu0 %v452
    %1367 = vmatprep.subr.mxu0 %v457
    %1368 = vmatpush1.msra.mxu0 %v456
    %1369 = vmatprep.subr.mxu0 %v461
    %1370 = vmatpush1.msra.mxu0 %v460
    %1371 = vmatprep.subr.mxu0 0.0
    %1372 = vmatpush1.msra.mxu0 0.0
    %1373 = vmatprep.subr.mxu0 0.0
    %1374 = vmatpush1.msra.mxu0 0.0
    %1375 = vmatprep.subr.mxu0 0.0
    %1376 = vmatpush1.msra.mxu0 0.0
    %1377 = vmatprep.subr.mxu0 0.0
    %1378 = vmatpush1.msra.mxu0 0.0
    %1379 = vmatprep.subr.mxu0 0.0
    %1380 = vmatpush1.msra.mxu0 0.0
    %1381 = vmatprep.subr.mxu0 0.0
    %1382 = vmatpush1.msra.mxu0 0.0
    %1383 = vmatprep.subr.mxu0 0.0
    %1384 = vmatpush1.msra.mxu0 0.0
    %1385 = vmatprep.subr.mxu0 0.0
    %1386 = vmatpush1.msra.mxu0 0.0
    %1387 = vmatprep.subr.mxu0 0.0
    %1388 = vmatpush1.msra.mxu0 0.0
    %1389 = vmatprep.subr.mxu0 0.0
    %1390 = vmatpush1.msra.mxu0 0.0
    %1391 = vmatprep.subr.mxu0 0.0
    %1392 = vmatpush1.msra.mxu0 0.0
    %1393 = vmatprep.subr.mxu0 0.0
    %1394 = vmatpush1.msra.mxu0 0.0
    %1395 = vmatprep.subr.mxu0 0.0
    %1396 = vmatpush1.msra.mxu0 0.0
    %1397 = vmatprep.subr.mxu0 0.0
    %1398 = vmatpush1.msra.mxu0 0.0
    %1399 = vmatprep.subr.mxu0 0.0
    %1400 = vmatpush1.msra.mxu0 0.0
    %1401 = vmatprep.subr.mxu0 0.0
    %1402 = vmatpush1.msra.mxu0 0.0
    %1403 = vmatprep.mubr.f32.mxu0 0.0
    %1404 = vmatmul.mubr.f32.gmra.mrb[0].mxu0 %v1333
    %v1405 = vpop.f32.mrb[0].mxu0
    %v1406 = vadd.f32 0.0, %v1405
    %v1407 = vpop.f32.mrb[0].mxu0
    %v1408 = vadd.f32 0.0, %v1407
    %1409 = vdwg.mxu0
    %1410 = vmatprep.subr.mxu0 %v403
    %1411 = vmatpush1.msra.mxu0 %v402
    %1412 = vmatprep.subr.mxu0 %v407
    %1413 = vmatpush1.msra.mxu0 %v406
    %1414 = vmatprep.subr.mxu0 %v411
    %1415 = vmatpush1.msra.mxu0 %v410
    %1416 = vmatprep.subr.mxu0 %v415
    %1417 = vmatpush1.msra.mxu0 %v414
    %1418 = vmatprep.subr.mxu0 %v419
    %1419 = vmatpush1.msra.mxu0 %v418
    %1420 = vmatprep.subr.mxu0 %v423
    %1421 = vmatpush1.msra.mxu0 %v422
    %1422 = vmatprep.subr.mxu0 %v427
    %1423 = vmatpush1.msra.mxu0 %v426
    %1424 = vmatprep.subr.mxu0 %v431
    %1425 = vmatpush1.msra.mxu0 %v430
    %1426 = vmatprep.subr.mxu0 %v435
    %1427 = vmatpush1.msra.mxu0 %v434
    %1428 = vmatprep.subr.mxu0 %v439
    %1429 = vmatpush1.msra.mxu0 %v438
    %1430 = vmatprep.subr.mxu0 %v443
    %1431 = vmatpush1.msra.mxu0 %v442
    %1432 = vmatprep.subr.mxu0 %v447
    %1433 = vmatpush1.msra.mxu0 %v446
    %1434 = vmatprep.subr.mxu0 %v451
    %1435 = vmatpush1.msra.mxu0 %v450
    %1436 = vmatprep.subr.mxu0 %v455
    %1437 = vmatpush1.msra.mxu0 %v454
    %1438 = vmatprep.subr.mxu0 %v459
    %1439 = vmatpush1.msra.mxu0 %v458
    %1440 = vmatprep.subr.mxu0 %v463
    %1441 = vmatpush1.msra.mxu0 %v462
    %1442 = vmatprep.subr.mxu0 0.0
    %1443 = vmatpush1.msra.mxu0 0.0
    %1444 = vmatprep.subr.mxu0 0.0
    %1445 = vmatpush1.msra.mxu0 0.0
    %1446 = vmatprep.subr.mxu0 0.0
    %1447 = vmatpush1.msra.mxu0 0.0
    %1448 = vmatprep.subr.mxu0 0.0
    %1449 = vmatpush1.msra.mxu0 0.0
    %1450 = vmatprep.subr.mxu0 0.0
    %1451 = vmatpush1.msra.mxu0 0.0
    %1452 = vmatprep.subr.mxu0 0.0
    %1453 = vmatpush1.msra.mxu0 0.0
    %1454 = vmatprep.subr.mxu0 0.0
    %1455 = vmatpush1.msra.mxu0 0.0
    %1456 = vmatprep.subr.mxu0 0.0
    %1457 = vmatpush1.msra.mxu0 0.0
    %1458 = vmatprep.subr.mxu0 0.0
    %1459 = vmatpush1.msra.mxu0 0.0
    %1460 = vmatprep.subr.mxu0 0.0
    %1461 = vmatpush1.msra.mxu0 0.0
    %1462 = vmatprep.subr.mxu0 0.0
    %1463 = vmatpush1.msra.mxu0 0.0
    %1464 = vmatprep.subr.mxu0 0.0
    %1465 = vmatpush1.msra.mxu0 0.0
    %1466 = vmatprep.subr.mxu0 0.0
    %1467 = vmatpush1.msra.mxu0 0.0
    %1468 = vmatprep.subr.mxu0 0.0
    %1469 = vmatpush1.msra.mxu0 0.0
    %1470 = vmatprep.subr.mxu0 0.0
    %1471 = vmatpush1.msra.mxu0 0.0
    %1472 = vmatprep.subr.mxu0 0.0
    %1473 = vmatpush1.msra.mxu0 0.0
    %1474 = vmatprep.mubr.f32.mxu0 0.0
    %1475 = vmatmul.mubr.f32.gmra.mrb[0].mxu0 %v1333
    %v1476 = vpop.f32.mrb[0].mxu0
    %v1477 = vadd.f32 0.0, %v1476
    %v1478 = vpop.f32.mrb[0].mxu0
    %v1479 = vadd.f32 0.0, %v1478
    %1480 = vdwg.mxu0
    %v1481 = vadd.f32 %v1335, %v1406
    %v1482 = vadd.f32 %v1336, %v1408
    %v1483 = vadd.f32 %v1337, %v1477
    %v1484 = vadd.f32 %v1338, %v1479
    %v1485 = vxor.u32 %v1481, 2147483648
    %v1486 = vmul.f32 %v1485, 1.442695
    %v1487 = vpow.pop %v1486
    %v1488 = vadd.f32 %v1487, 1.0
    %v1489 = vrcp.pop %v1488
    %v1490 = vmul.f32 1.0, %v1489
    %v1491 = vxor.u32 %v1482, 2147483648
    %v1492 = vmul.f32 %v1491, 1.442695
    %v1493 = vpow.pop %v1492
    %v1494 = vadd.f32 %v1493, 1.0
    %v1495 = vrcp.pop %v1494
    %v1496 = vmul.f32 1.0, %v1495
    %v1497 = vtanh.pop %v1483
    %v1498 = vxor.u32 %v1484, 2147483648
    %v1499 = vmul.f32 %v1498, 1.442695
    %v1500 = vpow.pop %v1499
    %v1501 = vadd.f32 %v1500, 1.0
    %v1502 = vrcp.pop %v1501
    %v1503 = vmul.f32 1.0, %v1502
    %v1504 = vmul.f32 %v1496, %v1331
    %v1505 = vmul.f32 %v1490, %v1497
    %v1506 = vadd.f32 %v1504, %v1505
    %v1507 = vtanh.pop %v1506
    %v1508 = vmul.f32 %v1503, %v1507
    %s1509 = scalar_lea.vmem [#allocation2], 224
    %v1510 = vld [vmem:[%s1509] sm:$0xff]
    %v1511 = vld [vmem:[%s1509 + $0x8] sm:$0xff]
    %v1512 = vld [vmem:[%s1509 + $0x10] sm:$0xff]
    %v1513 = vld [vmem:[%s1509 + $0x18] sm:$0xff]
    %1514 = vmatprep.subr.mxu0 %v401
    %1515 = vmatpush1.msra.mxu0 %v400
    %1516 = vmatprep.subr.mxu0 %v405
    %1517 = vmatpush1.msra.mxu0 %v404
    %1518 = vmatprep.subr.mxu0 %v409
    %1519 = vmatpush1.msra.mxu0 %v408
    %1520 = vmatprep.subr.mxu0 %v413
    %1521 = vmatpush1.msra.mxu0 %v412
    %1522 = vmatprep.subr.mxu0 %v417
    %1523 = vmatpush1.msra.mxu0 %v416
    %1524 = vmatprep.subr.mxu0 %v421
    %1525 = vmatpush1.msra.mxu0 %v420
    %1526 = vmatprep.subr.mxu0 %v425
    %1527 = vmatpush1.msra.mxu0 %v424
    %1528 = vmatprep.subr.mxu0 %v429
    %1529 = vmatpush1.msra.mxu0 %v428
    %1530 = vmatprep.subr.mxu0 %v433
    %1531 = vmatpush1.msra.mxu0 %v432
    %1532 = vmatprep.subr.mxu0 %v437
    %1533 = vmatpush1.msra.mxu0 %v436
    %1534 = vmatprep.subr.mxu0 %v441
    %1535 = vmatpush1.msra.mxu0 %v440
    %1536 = vmatprep.subr.mxu0 %v445
    %1537 = vmatpush1.msra.mxu0 %v444
    %1538 = vmatprep.subr.mxu0 %v449
    %1539 = vmatpush1.msra.mxu0 %v448
    %1540 = vmatprep.subr.mxu0 %v453
    %1541 = vmatpush1.msra.mxu0 %v452
    %1542 = vmatprep.subr.mxu0 %v457
    %1543 = vmatpush1.msra.mxu0 %v456
    %1544 = vmatprep.subr.mxu0 %v461
    %1545 = vmatpush1.msra.mxu0 %v460
    %1546 = vmatprep.subr.mxu0 0.0
    %1547 = vmatpush1.msra.mxu0 0.0
    %1548 = vmatprep.subr.mxu0 0.0
    %1549 = vmatpush1.msra.mxu0 0.0
    %1550 = vmatprep.subr.mxu0 0.0
    %1551 = vmatpush1.msra.mxu0 0.0
    %1552 = vmatprep.subr.mxu0 0.0
    %1553 = vmatpush1.msra.mxu0 0.0
    %1554 = vmatprep.subr.mxu0 0.0
    %1555 = vmatpush1.msra.mxu0 0.0
    %1556 = vmatprep.subr.mxu0 0.0
    %1557 = vmatpush1.msra.mxu0 0.0
    %1558 = vmatprep.subr.mxu0 0.0
    %1559 = vmatpush1.msra.mxu0 0.0
    %1560 = vmatprep.subr.mxu0 0.0
    %1561 = vmatpush1.msra.mxu0 0.0
    %1562 = vmatprep.subr.mxu0 0.0
    %1563 = vmatpush1.msra.mxu0 0.0
    %1564 = vmatprep.subr.mxu0 0.0
    %1565 = vmatpush1.msra.mxu0 0.0
    %1566 = vmatprep.subr.mxu0 0.0
    %1567 = vmatpush1.msra.mxu0 0.0
    %1568 = vmatprep.subr.mxu0 0.0
    %1569 = vmatpush1.msra.mxu0 0.0
    %1570 = vmatprep.subr.mxu0 0.0
    %1571 = vmatpush1.msra.mxu0 0.0
    %1572 = vmatprep.subr.mxu0 0.0
    %1573 = vmatpush1.msra.mxu0 0.0
    %1574 = vmatprep.subr.mxu0 0.0
    %1575 = vmatpush1.msra.mxu0 0.0
    %1576 = vmatprep.subr.mxu0 0.0
    %1577 = vmatpush1.msra.mxu0 0.0
    %1578 = vmatprep.mubr.f32.mxu0 0.0
    %1579 = vmatmul.mubr.f32.gmra.mrb[0].mxu0 %v1508
    %v1580 = vpop.f32.mrb[0].mxu0
    %v1581 = vadd.f32 0.0, %v1580
    %v1582 = vpop.f32.mrb[0].mxu0
    %v1583 = vadd.f32 0.0, %v1582
    %1584 = vdwg.mxu0
    %1585 = vmatprep.subr.mxu0 %v403
    %1586 = vmatpush1.msra.mxu0 %v402
    %1587 = vmatprep.subr.mxu0 %v407
    %1588 = vmatpush1.msra.mxu0 %v406
    %1589 = vmatprep.subr.mxu0 %v411
    %1590 = vmatpush1.msra.mxu0 %v410
    %1591 = vmatprep.subr.mxu0 %v415
    %1592 = vmatpush1.msra.mxu0 %v414
    %1593 = vmatprep.subr.mxu0 %v419
    %1594 = vmatpush1.msra.mxu0 %v418
    %1595 = vmatprep.subr.mxu0 %v423
    %1596 = vmatpush1.msra.mxu0 %v422
    %1597 = vmatprep.subr.mxu0 %v427
    %1598 = vmatpush1.msra.mxu0 %v426
    %1599 = vmatprep.subr.mxu0 %v431
    %1600 = vmatpush1.msra.mxu0 %v430
    %1601 = vmatprep.subr.mxu0 %v435
    %1602 = vmatpush1.msra.mxu0 %v434
    %1603 = vmatprep.subr.mxu0 %v439
    %1604 = vmatpush1.msra.mxu0 %v438
    %1605 = vmatprep.subr.mxu0 %v443
    %1606 = vmatpush1.msra.mxu0 %v442
    %1607 = vmatprep.subr.mxu0 %v447
    %1608 = vmatpush1.msra.mxu0 %v446
    %1609 = vmatprep.subr.mxu0 %v451
    %1610 = vmatpush1.msra.mxu0 %v450
    %1611 = vmatprep.subr.mxu0 %v455
    %1612 = vmatpush1.msra.mxu0 %v454
    %1613 = vmatprep.subr.mxu0 %v459
    %1614 = vmatpush1.msra.mxu0 %v458
    %1615 = vmatprep.subr.mxu0 %v463
    %1616 = vmatpush1.msra.mxu0 %v462
    %1617 = vmatprep.subr.mxu0 0.0
    %1618 = vmatpush1.msra.mxu0 0.0
    %1619 = vmatprep.subr.mxu0 0.0
    %1620 = vmatpush1.msra.mxu0 0.0
    %1621 = vmatprep.subr.mxu0 0.0
    %1622 = vmatpush1.msra.mxu0 0.0
    %1623 = vmatprep.subr.mxu0 0.0
    %1624 = vmatpush1.msra.mxu0 0.0
    %1625 = vmatprep.subr.mxu0 0.0
    %1626 = vmatpush1.msra.mxu0 0.0
    %1627 = vmatprep.subr.mxu0 0.0
    %1628 = vmatpush1.msra.mxu0 0.0
    %1629 = vmatprep.subr.mxu0 0.0
    %1630 = vmatpush1.msra.mxu0 0.0
    %1631 = vmatprep.subr.mxu0 0.0
    %1632 = vmatpush1.msra.mxu0 0.0
    %1633 = vmatprep.subr.mxu0 0.0
    %1634 = vmatpush1.msra.mxu0 0.0
    %1635 = vmatprep.subr.mxu0 0.0
    %1636 = vmatpush1.msra.mxu0 0.0
    %1637 = vmatprep.subr.mxu0 0.0
    %1638 = vmatpush1.msra.mxu0 0.0
    %1639 = vmatprep.subr.mxu0 0.0
    %1640 = vmatpush1.msra.mxu0 0.0
    %1641 = vmatprep.subr.mxu0 0.0
    %1642 = vmatpush1.msra.mxu0 0.0
    %1643 = vmatprep.subr.mxu0 0.0
    %1644 = vmatpush1.msra.mxu0 0.0
    %1645 = vmatprep.subr.mxu0 0.0
    %1646 = vmatpush1.msra.mxu0 0.0
    %1647 = vmatprep.subr.mxu0 0.0
    %1648 = vmatpush1.msra.mxu0 0.0
    %1649 = vmatprep.mubr.f32.mxu0 0.0
    %1650 = vmatmul.mubr.f32.gmra.mrb[0].mxu0 %v1508
    %v1651 = vpop.f32.mrb[0].mxu0
    %v1652 = vadd.f32 0.0, %v1651
    %v1653 = vpop.f32.mrb[0].mxu0
    %v1654 = vadd.f32 0.0, %v1653
    %1655 = vdwg.mxu0
    %v1656 = vadd.f32 %v1510, %v1581
    %v1657 = vadd.f32 %v1511, %v1583
    %v1658 = vadd.f32 %v1512, %v1652
    %v1659 = vadd.f32 %v1513, %v1654
    %v1660 = vxor.u32 %v1656, 2147483648
    %v1661 = vmul.f32 %v1660, 1.442695
    %v1662 = vpow.pop %v1661
    %v1663 = vadd.f32 %v1662, 1.0
    %v1664 = vrcp.pop %v1663
    %v1665 = vmul.f32 1.0, %v1664
    %v1666 = vxor.u32 %v1657, 2147483648
    %v1667 = vmul.f32 %v1666, 1.442695
    %v1668 = vpow.pop %v1667
    %v1669 = vadd.f32 %v1668, 1.0
    %v1670 = vrcp.pop %v1669
    %v1671 = vmul.f32 1.0, %v1670
    %v1672 = vtanh.pop %v1658
    %v1673 = vxor.u32 %v1659, 2147483648
    %v1674 = vmul.f32 %v1673, 1.442695
    %v1675 = vpow.pop %v1674
    %v1676 = vadd.f32 %v1675, 1.0
    %v1677 = vrcp.pop %v1676
    %v1678 = vmul.f32 1.0, %v1677
    %v1679 = vmul.f32 %v1671, %v1506
    %v1680 = vmul.f32 %v1665, %v1672
    %v1681 = vadd.f32 %v1679, %v1680
    %v1682 = vtanh.pop %v1681
    %v1683 = vmul.f32 %v1678, %v1682
    %v1684 = vld [vmem:[%s4] sm:$0xff]
    %v1685 = vld [vmem:[%s4 + $0x8] sm:$0xff]
    %v1686 = vld [vmem:[%s4 + $0x10] sm:$0xff]
    %v1687 = vld [vmem:[%s4 + $0x18] sm:$0xff]
    %v1688 = vld [vmem:[%s4 + $0x20] sm:$0xff]
    %v1689 = vld [vmem:[%s4 + $0x28] sm:$0xff]
    %v1690 = vld [vmem:[%s4 + $0x30] sm:$0xff]
    %v1691 = vld [vmem:[%s4 + $0x38] sm:$0xff]
    %v1692 = vld [vmem:[%s4 + $0x40] sm:$0xff]
    %v1693 = vld [vmem:[%s4 + $0x48] sm:$0xff]
    %v1694 = vld [vmem:[%s4 + $0x50] sm:$0xff]
    %v1695 = vld [vmem:[%s4 + $0x58] sm:$0xff]
    %v1696 = vld [vmem:[%s4 + $0x60] sm:$0xff]
    %v1697 = vld [vmem:[%s4 + $0x68] sm:$0xff]
    %v1698 = vld [vmem:[%s4 + $0x70] sm:$0xff]
    %v1699 = vld [vmem:[%s4 + $0x78] sm:$0xff]
    %v1700 = vld [vmem:[%s5] sm:$0x1]
    %v1702 = vlaneseq
    %v1703 = vshrl.u32 %v1702, 7
    %v1704 = vsub.s32 0, %v1703
    %v1705 = vrot.slane %v1700, %v1704
    %1707 = vmatprep.subr.mxu0 0.0
    %1708 = vmatpush1.msra.mxu0 %v1684
    %1709 = vmatprep.subr.mxu0 0.0
    %1710 = vmatpush1.msra.mxu0 %v1685
    %1711 = vmatprep.subr.mxu0 0.0
    %1712 = vmatpush1.msra.mxu0 %v1686
    %1713 = vmatprep.subr.mxu0 0.0
    %1714 = vmatpush1.msra.mxu0 %v1687
    %1715 = vmatprep.subr.mxu0 0.0
    %1716 = vmatpush1.msra.mxu0 %v1688
    %1717 = vmatprep.subr.mxu0 0.0
    %1718 = vmatpush1.msra.mxu0 %v1689
    %1719 = vmatprep.subr.mxu0 0.0
    %1720 = vmatpush1.msra.mxu0 %v1690
    %1721 = vmatprep.subr.mxu0 0.0
    %1722 = vmatpush1.msra.mxu0 %v1691
    %1723 = vmatprep.subr.mxu0 0.0
    %1724 = vmatpush1.msra.mxu0 %v1692
    %1725 = vmatprep.subr.mxu0 0.0
    %1726 = vmatpush1.msra.mxu0 %v1693
    %1727 = vmatprep.subr.mxu0 0.0
    %1728 = vmatpush1.msra.mxu0 %v1694
    %1729 = vmatprep.subr.mxu0 0.0
    %1730 = vmatpush1.msra.mxu0 %v1695
    %1731 = vmatprep.subr.mxu0 0.0
    %1732 = vmatpush1.msra.mxu0 %v1696
    %1733 = vmatprep.subr.mxu0 0.0
    %1734 = vmatpush1.msra.mxu0 %v1697
    %1735 = vmatprep.subr.mxu0 0.0
    %1736 = vmatpush1.msra.mxu0 %v1698
    %1737 = vmatprep.subr.mxu0 0.0
    %1738 = vmatpush1.msra.mxu0 %v1699
    %1739 = vmatprep.subr.mxu0 0.0
    %1740 = vmatpush1.msra.mxu0 0.0
    %1741 = vmatprep.subr.mxu0 0.0
    %1742 = vmatpush1.msra.mxu0 0.0
    %1743 = vmatprep.subr.mxu0 0.0
    %1744 = vmatpush1.msra.mxu0 0.0
    %1745 = vmatprep.subr.mxu0 0.0
    %1746 = vmatpush1.msra.mxu0 0.0
    %1747 = vmatprep.subr.mxu0 0.0
    %1748 = vmatpush1.msra.mxu0 0.0
    %1749 = vmatprep.subr.mxu0 0.0
    %1750 = vmatpush1.msra.mxu0 0.0
    %1751 = vmatprep.subr.mxu0 0.0
    %1752 = vmatpush1.msra.mxu0 0.0
    %1753 = vmatprep.subr.mxu0 0.0
    %1754 = vmatpush1.msra.mxu0 0.0
    %1755 = vmatprep.subr.mxu0 0.0
    %1756 = vmatpush1.msra.mxu0 0.0
    %1757 = vmatprep.subr.mxu0 0.0
    %1758 = vmatpush1.msra.mxu0 0.0
    %1759 = vmatprep.subr.mxu0 0.0
    %1760 = vmatpush1.msra.mxu0 0.0
    %1761 = vmatprep.subr.mxu0 0.0
    %1762 = vmatpush1.msra.mxu0 0.0
    %1763 = vmatprep.subr.mxu0 0.0
    %1764 = vmatpush1.msra.mxu0 0.0
    %1765 = vmatprep.subr.mxu0 0.0
    %1766 = vmatpush1.msra.mxu0 0.0
    %1767 = vmatprep.subr.mxu0 0.0
    %1768 = vmatpush1.msra.mxu0 0.0
    %1769 = vmatprep.subr.mxu0 0.0
    %1770 = vmatpush1.msra.mxu0 0.0
    %1771 = vmatprep.mubr.f32.mxu0 0.0
    %1772 = vmatmul.mubr.f32.gmra.mrb[0].mxu0 %v1683
    %v1773 = vpop.f32.mrb[0].mxu0
    %v1774 = vadd.f32 %v1705, %v1773
    %v1775 = vpop.f32.mrb[0].mxu0
    %1776 = vdwg.mxu0
    %vm1777 = vcmask 64512
    %1778 = vst.msk [vmem:[#allocation3] sm:$0xff] %vm1777, %v1774
    // Predicated region
    $region26: #{lstm_classifier.1} parent=1 // pred_check
      _
    $region27: #{lstm_classifier.1} parent=1 // pred_check_branch
      %1780 = sbr.rel (0) target = $region29
    $region28: #{lstm_classifier.1} parent=1 // pred_region
      %s1782 = ssub.s32 128, 128
      %1783 = vsyncadd [#allocation4], %s1782
      %s1785 = sshll.u32 [#allocation3], 4
      %s1786 = int_to_ptr.vmem [resolvable:$true] %s1785
      %1788 = dma.vmem_to_hbm [thread:$0]  %s1786, 128, %s6, [#allocation4]
    $region29: #{lstm_classifier.1} parent=1 // pred_fallthru
      _
    // Predicated region
    $region30: #{lstm_classifier.1} parent=1 // pred_check
      _
    $region31: #{lstm_classifier.1} parent=1 // pred_check_branch
      %1790 = sbr.rel (0) target = $region33
    $region32: #{lstm_classifier.1} parent=1 // pred_region
      %1791 = dma.done [#allocation4], 128
    $region33: #{lstm_classifier.1} parent=1 // pred_fallthru
      _
    %1792 = vsyncpa [#allocation4], 1

</llo_original>
